<compile_context>
chip_gen: v6e
topology: v6e:2x2x1
jax: 0.10.0
libtpu: 0.0.40
codegen_flags: <defaults>
</compile_context>

<pallas_src>
import math
import numpy as np
import jax
import jax.numpy as jnp
from jax.experimental import pallas as pl
from jax.experimental.pallas import tpu as pltpu


# ---------------------------------------------------------------------------
# Pallas fused multi-head cross-attention
# ---------------------------------------------------------------------------
def mha_cross_attention_pallas(x, condition, params, n_heads):
    """output = O( softmax(Q(x) K(cond)^T / sqrt(d_head)) V(cond) )"""
    B, Lq, D = x.shape
    Bc, Lkv, Dc = condition.shape
    assert B == Bc and D % n_heads == 0
    hd = D // n_heads
    inv_scale = 1.0 / math.sqrt(hd)

    # ---- host-side (trace-time) prep: done once, amortized over calls ----
    # 1/sqrt(d_head) folded into Wq / bq; Wk|Wv fused; biases packed into one
    # lane-dense (1, 4D) slab; everything cast to bf16 except the biases.
    wq = (params["wq"] * inv_scale).astype(jnp.bfloat16)                 # (D, D)
    wkv = jnp.concatenate([params["wk"], params["wv"]],
                          axis=1).astype(jnp.bfloat16)                   # (Dc, 2D)
    wo = params["wo"].astype(jnp.bfloat16)                               # (D, D)
    biases = jnp.concatenate(
        [params["bq"] * inv_scale, params["bk"], params["bv"], params["bo"]]
    ).reshape(1, 4 * D).astype(jnp.float32)                              # (1, 4D)

    x_bf = x.astype(jnp.bfloat16)
    c_bf = condition.astype(jnp.bfloat16)

    def kernel(x_ref, c_ref, wq_ref, wkv_ref, wo_ref, b_ref, o_ref):
        # Flatten batch onto the matmul M dim (leading-dim merges are free).
        xf = x_ref[...].reshape(B * Lq, D)        # (B*Lq, D)   bf16
        cf = c_ref[...].reshape(B * Lkv, Dc)      # (B*Lkv, Dc) bf16

        # Dense projections: full-width MXU matmuls, f32 accumulation.
        q = jnp.dot(xf, wq_ref[...], preferred_element_type=jnp.float32)    # (B*Lq, D)
        kv = jnp.dot(cf, wkv_ref[...], preferred_element_type=jnp.float32)  # (B*Lkv, 2D)

        q = q + b_ref[:, 0:D]            # scale already folded into wq / bq
        kv = kv + b_ref[:, D:3 * D]
        bo = b_ref[:, 3 * D:4 * D]

        q_bf = q.astype(jnp.bfloat16)
        kv_bf = kv.astype(jnp.bfloat16)

        # Split heads only for the score / PV step.  Static lane slices +
        # leading-axis stack + leading-dim reshapes only.  Batch-axis ordering
        # is (head, batch) for q/k/v alike.
        def split_heads(mat, base, rows):
            return jnp.stack(
                [mat[:, base + h * hd: base + (h + 1) * hd].reshape(B, rows, hd)
                 for h in range(n_heads)],
                axis=0).reshape(n_heads * B, rows, hd)

        qh = split_heads(q_bf, 0, Lq)     # (nH*B, Lq,  hd)
        kh = split_heads(kv_bf, 0, Lkv)   # (nH*B, Lkv, hd)
        vh = split_heads(kv_bf, D, Lkv)   # (nH*B, Lkv, hd)

        # Scores + numerically stable softmax (f32). Exact reciprocal.
        s = jnp.einsum("bqd,bkd->bqk", qh, kh,
                       preferred_element_type=jnp.float32)        # (nH*B, Lq, Lkv)
        m = jnp.max(s, axis=-1, keepdims=True)
        e = jnp.exp(s - m)
        p = e * pl.reciprocal(jnp.sum(e, axis=-1, keepdims=True))

        o = jnp.einsum("bqk,bkd->bqd", p.astype(jnp.bfloat16), vh,
                       preferred_element_type=jnp.float32)        # (nH*B, Lq, hd)

        # Head concat back to (B*Lq, D): lane-axis concatenate of per-head
        # slices (leading-dim split/indexing only, no transpose).
        o4 = o.reshape(n_heads, B, Lq, hd)
        oc = jnp.concatenate([o4[h] for h in range(n_heads)], axis=-1)  # (B, Lq, D)
        oc = oc.reshape(B * Lq, D).astype(jnp.bfloat16)

        # Dense output projection.
        out = jnp.dot(oc, wo_ref[...], preferred_element_type=jnp.float32) + bo
        o_ref[...] = out.reshape(B, Lq, D).astype(o_ref.dtype)

    return pl.pallas_call(
        kernel,
        out_shape=jax.ShapeDtypeStruct((B, Lq, D), jnp.float32),
        grid=(1,),
        in_specs=[
            pl.BlockSpec((B, Lq, D), lambda i: (0, 0, 0)),      # x (latents), bf16
            pl.BlockSpec((B, Lkv, Dc), lambda i: (0, 0, 0)),    # condition, bf16
            pl.BlockSpec((D, D), lambda i: (0, 0)),             # Wq * 1/sqrt(hd)
            pl.BlockSpec((Dc, 2 * D), lambda i: (0, 0)),        # Wk | Wv fused
            pl.BlockSpec((D, D), lambda i: (0, 0)),             # Wo
            pl.BlockSpec((1, 4 * D), lambda i: (0, 0)),         # [bq*s | bk | bv | bo]
        ],
        out_specs=pl.BlockSpec((B, Lq, D), lambda i: (0, 0, 0)),
        compiler_params=pltpu.CompilerParams(
            dimension_semantics=("arbitrary",)),
    )(x_bf, c_bf, wq, wkv, wo, biases)


# ---------------------------------------------------------------------------
# Pure-JAX reference (mirrors the PyTorch forward, f32 throughout)
# ---------------------------------------------------------------------------
def ref_mha_cross(x, cond, p, n_heads):
    B, Lq, D = x.shape
    hd = D // n_heads
    q = x @ p["wq"] + p["bq"]
    k = cond @ p["wk"] + p["bk"]
    v = cond @ p["wv"] + p["bv"]
    q = q.reshape(B, Lq, n_heads, hd).transpose(0, 2, 1, 3)
    k = k.reshape(B, -1, n_heads, hd).transpose(0, 2, 1, 3)
    v = v.reshape(B, -1, n_heads, hd).transpose(0, 2, 1, 3)
    w = jnp.einsum("bhqd,bhkd->bhqk", q, k) / math.sqrt(hd)
    w = jax.nn.softmax(w, axis=-1)
    o = jnp.einsum("bhqk,bhkd->bhqd", w, v)
    o = o.transpose(0, 2, 1, 3).reshape(B, Lq, D)
    return o @ p["wo"] + p["bo"]


# ---------------------------------------------------------------------------
if __name__ == "__main__":
    # MultiHeadCrossAttention(d_embed=32, n_heads=4, d_condition=16)
    B, Lq, Lkv = 2, 16, 8
    d_embed, d_condition, n_heads = 32, 16, 4

    key = jax.random.PRNGKey(0)
    kx, kc, *kw = jax.random.split(key, 10)
    x = jax.random.normal(kx, (B, Lq, d_embed), jnp.float32)
    cond = jax.random.normal(kc, (B, Lkv, d_condition), jnp.float32)

    def nrm(k, shape, s=0.2):
        return s * jax.random.normal(k, shape, jnp.float32)

    params = dict(
        wq=nrm(kw[0], (d_embed, d_embed)),
        bq=nrm(kw[1], (d_embed,)),
        wk=nrm(kw[2], (d_condition, d_embed)),
        bk=nrm(kw[3], (d_embed,)),
        wv=nrm(kw[4], (d_condition, d_embed)),
        bv=nrm(kw[5], (d_embed,)),
        wo=nrm(kw[6], (d_embed, d_embed)),
        bo=nrm(kw[7], (d_embed,)),
    )

    out = mha_cross_attention_pallas(x, cond, params, n_heads)
    out = jax.block_until_ready(out)

    ref = ref_mha_cross(x, cond, params, n_heads)
    ref = jax.block_until_ready(ref)

    assert out.shape == (B, Lq, d_embed)
    max_err = float(np.max(np.abs(np.asarray(out) - np.asarray(ref))))
    assert np.allclose(np.asarray(out), np.asarray(ref),
                       atol=5e-2, rtol=5e-2), max_err
    print("KERNEL_OK")
</pallas_src>

<mosaic_0001>
module attributes {stable_mosaic.version = 11 : i64} {
  func.func @kernel(%arg0: i32, %arg1: memref<2x16x32xbf16, #tpu.memory_space<vmem>>, %arg2: memref<2x8x16xbf16, #tpu.memory_space<vmem>>, %arg3: memref<32x32xbf16, #tpu.memory_space<vmem>>, %arg4: memref<16x64xbf16, #tpu.memory_space<vmem>>, %arg5: memref<32x32xbf16, #tpu.memory_space<vmem>>, %arg6: memref<1x128xf32, #tpu.memory_space<vmem>>, %arg7: memref<2x16x32xf32, #tpu.memory_space<vmem>>) attributes {dimension_semantics = [#tpu.dimension_semantics<arbitrary>], iteration_bounds = array<i64: 1>, scalar_prefetch = 0 : i64, scratch_operands = 0 : i64, tpu.core_type = #tpu.core_type<tc>, window_params = [{pipeline_mode = #tpu.pipeline_mode<synchronous>, transform_indices = @transform_0, window_bounds = array<i64: 2, 16, 32>}, {pipeline_mode = #tpu.pipeline_mode<synchronous>, transform_indices = @transform_1, window_bounds = array<i64: 2, 8, 16>}, {pipeline_mode = #tpu.pipeline_mode<synchronous>, transform_indices = @transform_2, window_bounds = array<i64: 32, 32>}, {pipeline_mode = #tpu.pipeline_mode<synchronous>, transform_indices = @transform_3, window_bounds = array<i64: 16, 64>}, {pipeline_mode = #tpu.pipeline_mode<synchronous>, transform_indices = @transform_4, window_bounds = array<i64: 32, 32>}, {pipeline_mode = #tpu.pipeline_mode<synchronous>, transform_indices = @transform_5, window_bounds = array<i64: 1, 128>}, {pipeline_mode = #tpu.pipeline_mode<synchronous>, transform_indices = @transform_6, window_bounds = array<i64: 2, 16, 32>}]} {
    %c0 = arith.constant 0 : index
    %c0_0 = arith.constant 0 : index
    %c0_1 = arith.constant 0 : index
    %0 = vector.load %arg1[%c0, %c0_0, %c0_1] : memref<2x16x32xbf16, #tpu.memory_space<vmem>>, vector<2x16x32xbf16>
    %1 = vector.shape_cast %0 : vector<2x16x32xbf16> to vector<32x32xbf16>
    %c0_2 = arith.constant 0 : index
    %c0_3 = arith.constant 0 : index
    %c0_4 = arith.constant 0 : index
    %2 = vector.load %arg2[%c0_2, %c0_3, %c0_4] : memref<2x8x16xbf16, #tpu.memory_space<vmem>>, vector<2x8x16xbf16>
    %3 = vector.shape_cast %2 : vector<2x8x16xbf16> to vector<16x16xbf16>
    %c0_5 = arith.constant 0 : index
    %c0_6 = arith.constant 0 : index
    %4 = vector.load %arg3[%c0_5, %c0_6] : memref<32x32xbf16, #tpu.memory_space<vmem>>, vector<32x32xbf16>
    %cst = arith.constant dense<0.000000e+00> : vector<32x32xf32>
    %5 = tpu.matmul %1, %4, %cst {dimension_numbers = #tpu.dot_dimension_numbers<[1], [0], [0], [1], [0, 0, 1, 1], [], []>} : vector<32x32xbf16>, vector<32x32xbf16>, vector<32x32xf32> -> vector<32x32xf32>
    %c0_7 = arith.constant 0 : index
    %c0_8 = arith.constant 0 : index
    %6 = vector.load %arg4[%c0_7, %c0_8] : memref<16x64xbf16, #tpu.memory_space<vmem>>, vector<16x64xbf16>
    %cst_9 = arith.constant dense<0.000000e+00> : vector<16x64xf32>
    %7 = tpu.matmul %3, %6, %cst_9 {dimension_numbers = #tpu.dot_dimension_numbers<[1], [0], [0], [1], [0, 0, 1, 1], [], []>} : vector<16x16xbf16>, vector<16x64xbf16>, vector<16x64xf32> -> vector<16x64xf32>
    %c0_10 = arith.constant 0 : index
    %c0_11 = arith.constant 0 : index
    %8 = vector.load %arg6[%c0_10, %c0_11] : memref<1x128xf32, #tpu.memory_space<vmem>>, vector<1x32xf32>
    %9 = vector.broadcast %8 : vector<1x32xf32> to vector<32x32xf32>
    %10 = arith.addf %5, %9 : vector<32x32xf32>
    %c0_12 = arith.constant 0 : index
    %c32 = arith.constant 32 : index
    %11 = vector.load %arg6[%c0_12, %c32] : memref<1x128xf32, #tpu.memory_space<vmem>>, vector<1x64xf32>
    %12 = vector.broadcast %11 : vector<1x64xf32> to vector<16x64xf32>
    %13 = arith.addf %7, %12 : vector<16x64xf32>
    %c0_13 = arith.constant 0 : index
    %c96 = arith.constant 96 : index
    %14 = vector.load %arg6[%c0_13, %c96] : memref<1x128xf32, #tpu.memory_space<vmem>>, vector<1x32xf32>
    %15 = arith.truncf %10 : vector<32x32xf32> to vector<32x32xbf16>
    %16 = arith.truncf %13 : vector<16x64xf32> to vector<16x64xbf16>
    %17 = vector.extract_strided_slice %15 {offsets = [0, 0], sizes = [32, 8], strides = [1, 1]} : vector<32x32xbf16> to vector<32x8xbf16>
    %18 = vector.shape_cast %17 : vector<32x8xbf16> to vector<2x16x8xbf16>
    %19 = vector.extract_strided_slice %15 {offsets = [0, 8], sizes = [32, 8], strides = [1, 1]} : vector<32x32xbf16> to vector<32x8xbf16>
    %20 = vector.shape_cast %19 : vector<32x8xbf16> to vector<2x16x8xbf16>
    %21 = vector.extract_strided_slice %15 {offsets = [0, 16], sizes = [32, 8], strides = [1, 1]} : vector<32x32xbf16> to vector<32x8xbf16>
    %22 = vector.shape_cast %21 : vector<32x8xbf16> to vector<2x16x8xbf16>
    %23 = vector.extract_strided_slice %15 {offsets = [0, 24], sizes = [32, 8], strides = [1, 1]} : vector<32x32xbf16> to vector<32x8xbf16>
    %24 = vector.shape_cast %23 : vector<32x8xbf16> to vector<2x16x8xbf16>
    %25 = vector.shape_cast %18 : vector<2x16x8xbf16> to vector<1x2x16x8xbf16>
    %26 = vector.shape_cast %20 : vector<2x16x8xbf16> to vector<1x2x16x8xbf16>
    %27 = vector.shape_cast %22 : vector<2x16x8xbf16> to vector<1x2x16x8xbf16>
    %28 = vector.shape_cast %24 : vector<2x16x8xbf16> to vector<1x2x16x8xbf16>
    %29 = tpu.concatenate %25, %26, %27, %28 in 0 : vector<1x2x16x8xbf16>, vector<1x2x16x8xbf16>, vector<1x2x16x8xbf16>, vector<1x2x16x8xbf16> -> vector<4x2x16x8xbf16>
    %30 = vector.shape_cast %29 : vector<4x2x16x8xbf16> to vector<8x16x8xbf16>
    %31 = vector.extract_strided_slice %16 {offsets = [0, 0], sizes = [16, 8], strides = [1, 1]} : vector<16x64xbf16> to vector<16x8xbf16>
    %32 = vector.shape_cast %31 : vector<16x8xbf16> to vector<2x8x8xbf16>
    %33 = vector.extract_strided_slice %16 {offsets = [0, 8], sizes = [16, 8], strides = [1, 1]} : vector<16x64xbf16> to vector<16x8xbf16>
    %34 = vector.shape_cast %33 : vector<16x8xbf16> to vector<2x8x8xbf16>
    %35 = vector.extract_strided_slice %16 {offsets = [0, 16], sizes = [16, 8], strides = [1, 1]} : vector<16x64xbf16> to vector<16x8xbf16>
    %36 = vector.shape_cast %35 : vector<16x8xbf16> to vector<2x8x8xbf16>
    %37 = vector.extract_strided_slice %16 {offsets = [0, 24], sizes = [16, 8], strides = [1, 1]} : vector<16x64xbf16> to vector<16x8xbf16>
    %38 = vector.shape_cast %37 : vector<16x8xbf16> to vector<2x8x8xbf16>
    %39 = vector.shape_cast %32 : vector<2x8x8xbf16> to vector<1x2x8x8xbf16>
    %40 = vector.shape_cast %34 : vector<2x8x8xbf16> to vector<1x2x8x8xbf16>
    %41 = vector.shape_cast %36 : vector<2x8x8xbf16> to vector<1x2x8x8xbf16>
    %42 = vector.shape_cast %38 : vector<2x8x8xbf16> to vector<1x2x8x8xbf16>
    %43 = tpu.concatenate %39, %40, %41, %42 in 0 : vector<1x2x8x8xbf16>, vector<1x2x8x8xbf16>, vector<1x2x8x8xbf16>, vector<1x2x8x8xbf16> -> vector<4x2x8x8xbf16>
    %44 = vector.shape_cast %43 : vector<4x2x8x8xbf16> to vector<8x8x8xbf16>
    %45 = vector.extract_strided_slice %16 {offsets = [0, 32], sizes = [16, 8], strides = [1, 1]} : vector<16x64xbf16> to vector<16x8xbf16>
    %46 = vector.shape_cast %45 : vector<16x8xbf16> to vector<2x8x8xbf16>
    %47 = vector.extract_strided_slice %16 {offsets = [0, 40], sizes = [16, 8], strides = [1, 1]} : vector<16x64xbf16> to vector<16x8xbf16>
    %48 = vector.shape_cast %47 : vector<16x8xbf16> to vector<2x8x8xbf16>
    %49 = vector.extract_strided_slice %16 {offsets = [0, 48], sizes = [16, 8], strides = [1, 1]} : vector<16x64xbf16> to vector<16x8xbf16>
    %50 = vector.shape_cast %49 : vector<16x8xbf16> to vector<2x8x8xbf16>
    %51 = vector.extract_strided_slice %16 {offsets = [0, 56], sizes = [16, 8], strides = [1, 1]} : vector<16x64xbf16> to vector<16x8xbf16>
    %52 = vector.shape_cast %51 : vector<16x8xbf16> to vector<2x8x8xbf16>
    %53 = vector.shape_cast %46 : vector<2x8x8xbf16> to vector<1x2x8x8xbf16>
    %54 = vector.shape_cast %48 : vector<2x8x8xbf16> to vector<1x2x8x8xbf16>
    %55 = vector.shape_cast %50 : vector<2x8x8xbf16> to vector<1x2x8x8xbf16>
    %56 = vector.shape_cast %52 : vector<2x8x8xbf16> to vector<1x2x8x8xbf16>
    %57 = tpu.concatenate %53, %54, %55, %56 in 0 : vector<1x2x8x8xbf16>, vector<1x2x8x8xbf16>, vector<1x2x8x8xbf16>, vector<1x2x8x8xbf16> -> vector<4x2x8x8xbf16>
    %58 = vector.shape_cast %57 : vector<4x2x8x8xbf16> to vector<8x8x8xbf16>
    "tpu.trace_start"() <{level = 10 : i32, message = "bqd,bkd->bqk"}> : () -> ()
    %cst_14 = arith.constant dense<0.000000e+00> : vector<8x16x8xf32>
    %59 = tpu.matmul %30, %44, %cst_14 {dimension_numbers = #tpu.dot_dimension_numbers<[2], [2], [1], [1], [0, 0, 0, 1, 1, 1], [0], [0]>} : vector<8x16x8xbf16>, vector<8x8x8xbf16>, vector<8x16x8xf32> -> vector<8x16x8xf32>
    "tpu.trace_stop"() : () -> ()
    %cst_15 = arith.constant dense<0xFF800000> : vector<8x16xf32>
    %60 = vector.multi_reduction <maximumf>, %59, %cst_15 [2] : vector<8x16x8xf32> to vector<8x16xf32>
    %61 = vector.shape_cast %60 : vector<8x16xf32> to vector<8x16x1xf32>
    %62 = vector.broadcast %61 : vector<8x16x1xf32> to vector<8x16x8xf32>
    %63 = arith.subf %59, %62 : vector<8x16x8xf32>
    %64 = math.exp %63 : vector<8x16x8xf32>
    %cst_16 = arith.constant dense<0.000000e+00> : vector<8x16xf32>
    %65 = vector.multi_reduction <add>, %64, %cst_16 [2] : vector<8x16x8xf32> to vector<8x16xf32>
    %66 = vector.shape_cast %65 : vector<8x16xf32> to vector<8x16x1xf32>
    %67 = tpu.reciprocal %66 : vector<8x16x1xf32> -> vector<8x16x1xf32>
    %68 = vector.broadcast %67 : vector<8x16x1xf32> to vector<8x16x8xf32>
    %69 = arith.mulf %64, %68 : vector<8x16x8xf32>
    %70 = arith.truncf %69 : vector<8x16x8xf32> to vector<8x16x8xbf16>
    "tpu.trace_start"() <{level = 10 : i32, message = "bqk,bkd->bqd"}> : () -> ()
    %cst_17 = arith.constant dense<0.000000e+00> : vector<8x16x8xf32>
    %71 = tpu.matmul %70, %58, %cst_17 {dimension_numbers = #tpu.dot_dimension_numbers<[2], [1], [1], [2], [0, 0, 0, 1, 1, 2], [0], [0]>} : vector<8x16x8xbf16>, vector<8x8x8xbf16>, vector<8x16x8xf32> -> vector<8x16x8xf32>
    "tpu.trace_stop"() : () -> ()
    %72 = vector.shape_cast %71 : vector<8x16x8xf32> to vector<4x2x16x8xf32>
    %73 = vector.extract_strided_slice %72 {offsets = [0, 0, 0, 0], sizes = [1, 2, 16, 8], strides = [1, 1, 1, 1]} : vector<4x2x16x8xf32> to vector<1x2x16x8xf32>
    %74 = vector.shape_cast %73 : vector<1x2x16x8xf32> to vector<2x16x8xf32>
    %75 = vector.extract_strided_slice %72 {offsets = [1, 0, 0, 0], sizes = [1, 2, 16, 8], strides = [1, 1, 1, 1]} : vector<4x2x16x8xf32> to vector<1x2x16x8xf32>
    %76 = vector.shape_cast %75 : vector<1x2x16x8xf32> to vector<2x16x8xf32>
    %77 = vector.extract_strided_slice %72 {offsets = [2, 0, 0, 0], sizes = [1, 2, 16, 8], strides = [1, 1, 1, 1]} : vector<4x2x16x8xf32> to vector<1x2x16x8xf32>
    %78 = vector.shape_cast %77 : vector<1x2x16x8xf32> to vector<2x16x8xf32>
    %79 = vector.extract_strided_slice %72 {offsets = [3, 0, 0, 0], sizes = [1, 2, 16, 8], strides = [1, 1, 1, 1]} : vector<4x2x16x8xf32> to vector<1x2x16x8xf32>
    %80 = vector.shape_cast %79 : vector<1x2x16x8xf32> to vector<2x16x8xf32>
    %81 = tpu.concatenate %74, %76, %78, %80 in 2 : vector<2x16x8xf32>, vector<2x16x8xf32>, vector<2x16x8xf32>, vector<2x16x8xf32> -> vector<2x16x32xf32>
    %82 = vector.shape_cast %81 : vector<2x16x32xf32> to vector<32x32xf32>
    %83 = arith.truncf %82 : vector<32x32xf32> to vector<32x32xbf16>
    %c0_18 = arith.constant 0 : index
    %c0_19 = arith.constant 0 : index
    %84 = vector.load %arg5[%c0_18, %c0_19] : memref<32x32xbf16, #tpu.memory_space<vmem>>, vector<32x32xbf16>
    %cst_20 = arith.constant dense<0.000000e+00> : vector<32x32xf32>
    %85 = tpu.matmul %83, %84, %cst_20 {dimension_numbers = #tpu.dot_dimension_numbers<[1], [0], [0], [1], [0, 0, 1, 1], [], []>} : vector<32x32xbf16>, vector<32x32xbf16>, vector<32x32xf32> -> vector<32x32xf32>
    %86 = vector.broadcast %14 : vector<1x32xf32> to vector<32x32xf32>
    %87 = arith.addf %85, %86 : vector<32x32xf32>
    %88 = vector.shape_cast %87 : vector<32x32xf32> to vector<2x16x32xf32>
    %c0_21 = arith.constant 0 : index
    %c0_22 = arith.constant 0 : index
    %c0_23 = arith.constant 0 : index
    %89 = vector.load %arg7[%c0_21, %c0_22, %c0_23] : memref<2x16x32xf32, #tpu.memory_space<vmem>>, vector<2x16x32xf32>
    tpu.vector_store %arg7[%c0_21, %c0_22, %c0_23], %88 {strides = array<i32>} : memref<2x16x32xf32, #tpu.memory_space<vmem>>, vector<2x16x32xf32>,
    return
  }
  func.func @transform_0(%arg0: i32) -> (i32, i32, i32) {
    %c0_i32 = arith.constant 0 : i32
    %c0_i32_0 = arith.constant 0 : i32
    %c0_i32_1 = arith.constant 0 : i32
    %c0_i32_2 = arith.constant 0 : i32
    return %c0_i32, %c0_i32_0, %c0_i32_1 : i32, i32, i32
  }
  func.func @transform_1(%arg0: i32) -> (i32, i32, i32) {
    %c0_i32 = arith.constant 0 : i32
    %c0_i32_0 = arith.constant 0 : i32
    %c0_i32_1 = arith.constant 0 : i32
    %c0_i32_2 = arith.constant 0 : i32
    return %c0_i32, %c0_i32_0, %c0_i32_1 : i32, i32, i32
  }
  func.func @transform_2(%arg0: i32) -> (i32, i32) {
    %c0_i32 = arith.constant 0 : i32
    %c0_i32_0 = arith.constant 0 : i32
    %c0_i32_1 = arith.constant 0 : i32
    return %c0_i32, %c0_i32_0 : i32, i32
  }
  func.func @transform_3(%arg0: i32) -> (i32, i32) {
    %c0_i32 = arith.constant 0 : i32
    %c0_i32_0 = arith.constant 0 : i32
    %c0_i32_1 = arith.constant 0 : i32
    return %c0_i32, %c0_i32_0 : i32, i32
  }
  func.func @transform_4(%arg0: i32) -> (i32, i32) {
    %c0_i32 = arith.constant 0 : i32
    %c0_i32_0 = arith.constant 0 : i32
    %c0_i32_1 = arith.constant 0 : i32
    return %c0_i32, %c0_i32_0 : i32, i32
  }
  func.func @transform_5(%arg0: i32) -> (i32, i32) {
    %c0_i32 = arith.constant 0 : i32
    %c0_i32_0 = arith.constant 0 : i32
    %c0_i32_1 = arith.constant 0 : i32
    return %c0_i32, %c0_i32_0 : i32, i32
  }
  func.func @transform_6(%arg0: i32) -> (i32, i32, i32) {
    %c0_i32 = arith.constant 0 : i32
    %c0_i32_0 = arith.constant 0 : i32
    %c0_i32_1 = arith.constant 0 : i32
    %c0_i32_2 = arith.constant 0 : i32
    return %c0_i32, %c0_i32_0, %c0_i32_1 : i32, i32, i32
  }
}

</mosaic_0001>

<llo_original>
// kernel: tpu_custom_call.1
$region0: #{tpu_custom_call.1}
  #allocation0 [shape = 'u32[]', space=smem, size = 0x4, offset = 0x4, fixed_abs, tag = 'smem constant byte address 0x4 - core index']
  #allocation1 [shape = 'u32[144,128]{1,0:T(1,128)}', space=vmem, size = 0x12000, scoped, tag = 'internal scratch']
  %s0 = inlined_call_operand.hbm [shape: bf16[2,16,32], index: 0, kind: input, shape index: {}]
  %s1 = inlined_call_operand.hbm [shape: bf16[2,8,16], index: 1, kind: input, shape index: {}]
  %s2 = inlined_call_operand.hbm [shape: bf16[32,32], index: 2, kind: input, shape index: {}]
  %s3 = inlined_call_operand.hbm [shape: bf16[16,64], index: 3, kind: input, shape index: {}]
  %s4 = inlined_call_operand.hbm [shape: bf16[32,32], index: 4, kind: input, shape index: {}]
  %s5 = inlined_call_operand.vmem [shape: f32[1,128], index: 5, kind: input, shape index: {}]
  %s6 = inlined_call_operand.hbm [shape: f32[2,16,32], index: 6, kind: output, shape index: {}]
  %s7 = sld [smem:[#allocation0]]
  $region54: #{tpu_custom_call.1} parent=0
    _
  %s9 = ssub.s32 1, %s7
  %s10 = scalar_select 0, %s9, %s7
  $region1: #{tpu_custom_call.1} parent=0
    #allocation2 [shape = 'u8[8192]{0}', space=vmem, size = 0x2000, scoped, tag = 'input window, operand 0, single buffered']
    #allocation3 [shape = 's32[1]{0}', space=sflag, size = 0x4, scoped, tag = 'scoped memory for tpu_custom_call.1']
    #allocation4 [shape = 's32[1]{0}', space=sflag, size = 0x4, scoped, tag = 'scoped memory for tpu_custom_call.1']
    #allocation5 [shape = 'u8[4096]{0}', space=vmem, size = 0x1000, scoped, tag = 'input window, operand 1, single buffered']
    #allocation6 [shape = 's32[1]{0}', space=sflag, size = 0x4, scoped, tag = 'scoped memory for tpu_custom_call.1']
    #allocation7 [shape = 'u8[8192]{0}', space=vmem, size = 0x2000, scoped, tag = 'input window, operand 2, single buffered']
    #allocation8 [shape = 'u8[4096]{0}', space=vmem, size = 0x1000, scoped, tag = 'input window, operand 3, single buffered']
    #allocation9 [shape = 's32[1]{0}', space=sflag, size = 0x4, scoped, tag = 'scoped memory for tpu_custom_call.1']
    #allocation10 [shape = 'u8[8192]{0}', space=vmem, size = 0x2000, scoped, tag = 'input window, operand 4, single buffered']
    #allocation11 [shape = 'u8[16384]{0}', space=vmem, size = 0x4000, scoped, tag = 'output window, operand 0, single buffered']
    %11 = vsyncpa [#allocation3], 0
    %12 = vsyncpa [#allocation6], 0
    %13 = vsyncpa [#allocation9], 0
    %14 = vsyncpa [#allocation4], 0
    // Predicated region
    $region2: #{tpu_custom_call.1} parent=1 // pred_check
      _
    $region3: #{tpu_custom_call.1} parent=1 // pred_check_branch
      %16 = sbr.rel (0) target = $region5
    $region4: #{tpu_custom_call.1} parent=1 // pred_region
      %s18 = ssub.s32 256, 256
      %19 = vsyncadd [#allocation3], %s18
      %s20 = sshll.u32 [#allocation2], 4
      %s21 = int_to_ptr.vmem [resolvable:$true] %s20
      %26 = dma.hbm_to_vmem [thread:$0]  %s0, 256, %s21, [#allocation3], 64, 64, 4
    $region5: #{tpu_custom_call.1} parent=1 // pred_fallthru
      _
    // Predicated region
    $region6: #{tpu_custom_call.1} parent=1 // pred_check
      _
    $region7: #{tpu_custom_call.1} parent=1 // pred_check_branch
      %28 = sbr.rel (0) target = $region9
    $region8: #{tpu_custom_call.1} parent=1 // pred_region
      %s30 = ssub.s32 128, 128
      %31 = vsyncadd [#allocation6], %s30
      %s32 = sshll.u32 [#allocation5], 4
      %s33 = int_to_ptr.vmem [resolvable:$true] %s32
      %38 = dma.hbm_to_vmem [thread:$0]  %s1, 128, %s33, [#allocation6], 64, 64, 4
    $region9: #{tpu_custom_call.1} parent=1 // pred_fallthru
      _
    // Predicated region
    $region10: #{tpu_custom_call.1} parent=1 // pred_check
      _
    $region11: #{tpu_custom_call.1} parent=1 // pred_check_branch
      %40 = sbr.rel (0) target = $region13
    $region12: #{tpu_custom_call.1} parent=1 // pred_region
      %s42 = ssub.s32 256, 256
      %43 = vsyncadd [#allocation6], %s42
      %s44 = sshll.u32 [#allocation7], 4
      %s45 = int_to_ptr.vmem [resolvable:$true] %s44
      %50 = dma.hbm_to_vmem [thread:$0]  %s2, 256, %s45, [#allocation6], 64, 64, 4
    $region13: #{tpu_custom_call.1} parent=1 // pred_fallthru
      _
    // Predicated region
    $region14: #{tpu_custom_call.1} parent=1 // pred_check
      _
    $region15: #{tpu_custom_call.1} parent=1 // pred_check_branch
      %52 = sbr.rel (0) target = $region17
    $region16: #{tpu_custom_call.1} parent=1 // pred_region
      %s54 = ssub.s32 128, 128
      %55 = vsyncadd [#allocation9], %s54
      %s56 = sshll.u32 [#allocation8], 4
      %s57 = int_to_ptr.vmem [resolvable:$true] %s56
      %62 = dma.hbm_to_vmem [thread:$0]  %s3, 128, %s57, [#allocation9], 64, 64, 4
    $region17: #{tpu_custom_call.1} parent=1 // pred_fallthru
      _
    // Predicated region
    $region18: #{tpu_custom_call.1} parent=1 // pred_check
      _
    $region19: #{tpu_custom_call.1} parent=1 // pred_check_branch
      %64 = sbr.rel (0) target = $region21
    $region20: #{tpu_custom_call.1} parent=1 // pred_region
      %s66 = ssub.s32 256, 256
      %67 = vsyncadd [#allocation9], %s66
      %s68 = sshll.u32 [#allocation10], 4
      %s69 = int_to_ptr.vmem [resolvable:$true] %s68
      %74 = dma.hbm_to_vmem [thread:$0]  %s4, 256, %s69, [#allocation9], 64, 64, 4
    $region21: #{tpu_custom_call.1} parent=1 // pred_fallthru
      _
    // Predicated region
    $region22: #{tpu_custom_call.1} parent=1 // pred_check
      _
    $region23: #{tpu_custom_call.1} parent=1 // pred_check_branch
      %76 = sbr.rel (0) target = $region25
    $region24: #{tpu_custom_call.1} parent=1 // pred_region
      _
    $region25: #{tpu_custom_call.1} parent=1 // pred_fallthru
      _
    // Predicated region
    $region26: #{tpu_custom_call.1} parent=1 // pred_check
      _
    $region27: #{tpu_custom_call.1} parent=1 // pred_check_branch
      %78 = sbr.rel (0) target = $region29
    $region28: #{tpu_custom_call.1} parent=1 // pred_region
      %79 = dma.done [#allocation3], 256
    $region29: #{tpu_custom_call.1} parent=1 // pred_fallthru
      _
    // Predicated region
    $region30: #{tpu_custom_call.1} parent=1 // pred_check
      _
    $region31: #{tpu_custom_call.1} parent=1 // pred_check_branch
      %81 = sbr.rel (0) target = $region33
    $region32: #{tpu_custom_call.1} parent=1 // pred_region
      %82 = dma.done [#allocation6], 128
    $region33: #{tpu_custom_call.1} parent=1 // pred_fallthru
      _
    // Predicated region
    $region34: #{tpu_custom_call.1} parent=1 // pred_check
      _
    $region35: #{tpu_custom_call.1} parent=1 // pred_check_branch
      %84 = sbr.rel (0) target = $region37
    $region36: #{tpu_custom_call.1} parent=1 // pred_region
      %85 = dma.done [#allocation6], 256
    $region37: #{tpu_custom_call.1} parent=1 // pred_fallthru
      _
    // Predicated region
    $region38: #{tpu_custom_call.1} parent=1 // pred_check
      _
    $region39: #{tpu_custom_call.1} parent=1 // pred_check_branch
      %87 = sbr.rel (0) target = $region41
    $region40: #{tpu_custom_call.1} parent=1 // pred_region
      %88 = dma.done [#allocation9], 128
    $region41: #{tpu_custom_call.1} parent=1 // pred_fallthru
      _
    // Predicated region
    $region42: #{tpu_custom_call.1} parent=1 // pred_check
      _
    $region43: #{tpu_custom_call.1} parent=1 // pred_check_branch
      %90 = sbr.rel (0) target = $region45
    $region44: #{tpu_custom_call.1} parent=1 // pred_region
      %91 = dma.done [#allocation9], 256
    $region45: #{tpu_custom_call.1} parent=1 // pred_fallthru
      _
    %v93 = vld [vmem:[#allocation2] sm:$0xf]
    %v94 = vld [vmem:[#allocation2 + $0x4] sm:$0xf]
    %v95 = vld [vmem:[#allocation2 + $0x8] sm:$0xf]
    %v96 = vld [vmem:[#allocation2 + $0xc] sm:$0xf]
    %v97 = vld [vmem:[#allocation5] sm:$0xf]
    %v98 = vld [vmem:[#allocation5 + $0x4] sm:$0xf]
    %v99 = vld [vmem:[#allocation7] sm:$0xf]
    %v100 = vld [vmem:[#allocation7 + $0x4] sm:$0xf]
    %v101 = vld [vmem:[#allocation7 + $0x8] sm:$0xf]
    %v102 = vld [vmem:[#allocation7 + $0xc] sm:$0xf]
    %v103 = vld [vmem:[#allocation8] sm:$0xf]
    %v104 = vld [vmem:[#allocation8 + $0x4] sm:$0xf]
    %v105 = vld [vmem:[%s5] sm:$0x1]
    %v107 = vlaneseq
    %v108 = vshrl.u32 %v107, 7
    %v109 = vsub.s32 0, %v108
    %v110 = vrot.slane %v105, %v109
    %v116 = vunpack.c.l.b16 %v93
    %v117 = vunpack.c.l.b16 %v94
    %v118 = vunpack.c.l.b16 %v95
    %v119 = vunpack.c.l.b16 %v96
    %v120 = vpack.c.b16 %v117, %v116
    %v121 = vpack.c.b16 %v119, %v118
    %v126 = vunpack.c.l.b16 %v99
    %v127 = vunpack.c.l.b16 %v100
    %v128 = vunpack.c.l.b16 %v101
    %v129 = vunpack.c.l.b16 %v102
    %v130 = vpack.c.b16 %v127, %v126
    %v131 = vpack.c.b16 %v129, %v128
    %vm134 = vcmask 261120
    %v136 = vsel %vm134, %v120, 0
    %v139 = vsel %vm134, %v121, 0
    %141 = vmatprep.subr.bf16.mxu0 0
    %142 = vmatpush1.bf16.msra.mxu0 0
    %143 = vmatprep.subr.bf16.mxu0 0
    %144 = vmatpush1.bf16.msra.mxu0 0
    %145 = vmatprep.subr.bf16.mxu0 0
    %146 = vmatpush1.bf16.msra.mxu0 0
    %147 = vmatprep.subr.bf16.mxu0 0
    %148 = vmatpush1.bf16.msra.mxu0 0
    %149 = vmatprep.subr.bf16.mxu0 0
    %150 = vmatpush1.bf16.msra.mxu0 0
    %151 = vmatprep.subr.bf16.mxu0 0
    %152 = vmatpush1.bf16.msra.mxu0 0
    %153 = vmatprep.subr.bf16.mxu0 0
    %154 = vmatpush1.bf16.msra.mxu0 %v131
    %155 = vmatprep.subr.bf16.mxu0 0
    %156 = vmatpush1.bf16.msra.mxu0 %v130
    %157 = vmatprep.subr.bf16.mxu0 0
    %158 = vmatpush2.bf16.msra.mxu0 0
    %159 = vmatprep.subr.bf16.mxu0 0
    %160 = vmatpush2.bf16.msra.mxu0 0
    %161 = vmatprep.subr.bf16.mxu0 0
    %162 = vmatpush2.bf16.msra.mxu0 0
    %163 = vmatprep.subr.bf16.mxu0 0
    %164 = vmatpush2.bf16.msra.mxu0 0
    %165 = vmatprep.subr.bf16.mxu0 0
    %166 = vmatpush2.bf16.msra.mxu0 0
    %167 = vmatprep.subr.bf16.mxu0 0
    %168 = vmatpush2.bf16.msra.mxu0 0
    %169 = vmatprep.subr.bf16.mxu0 0
    %170 = vmatpush2.bf16.msra.mxu0 0
    %171 = vmatprep.subr.bf16.mxu0 0
    %172 = vmatpush2.bf16.msra.mxu0 0
    %173 = vmatprep.mubr.bf16.mxu0 0
    %174 = vmatmul.mubr.bf16.gmra.mxu0 %v136
    %v175 = vpop.f32.mrf.mxu0
    %v176 = vadd.f32 %v110, %v175
    %v177 = vpop.f32.mrf.mxu0
    %v178 = vpop.f32.mrf.mxu0
    %v179 = vadd.f32 %v110, %v178
    %v180 = vpop.f32.mrf.mxu0
    %181 = vmatprep.mubr.bf16.mxu0 0
    %182 = vmatmul.mubr.bf16.gmra.mxu0 %v139
    %v183 = vpop.f32.mrf.mxu0
    %v184 = vadd.f32 %v110, %v183
    %v185 = vpop.f32.mrf.mxu0
    %v186 = vpop.f32.mrf.mxu0
    %v187 = vadd.f32 %v110, %v186
    %v188 = vpop.f32.mrf.mxu0
    %189 = vdwg.mxu0
    %v192 = vunpack.c.l.b16 %v97
    %v193 = vunpack.c.l.b16 %v98
    %v194 = vpack.c.b16 %v193, %v192
    %v197 = vunpack.c.l.b16 %v103
    %v198 = vunpack.c.l.b16 %v104
    %v199 = vpack.c.b16 %v198, %v197
    %201 = vrot.lane.b32.xlu0 %v110, 96
    %v202 = vpop.permute.xlu0 %201
    %vm204 = vcmask 130048
    %v206 = vsel %vm204, %v194, 0
    %208 = vmatprep.subr.bf16.mxu0 0
    %209 = vmatpush1.bf16.msra.mxu0 0
    %210 = vmatprep.subr.bf16.mxu0 0
    %211 = vmatpush1.bf16.msra.mxu0 0
    %212 = vmatprep.subr.bf16.mxu0 0
    %213 = vmatpush1.bf16.msra.mxu0 0
    %214 = vmatprep.subr.bf16.mxu0 0
    %215 = vmatpush1.bf16.msra.mxu0 0
    %216 = vmatprep.subr.bf16.mxu0 0
    %217 = vmatpush1.bf16.msra.mxu0 0
    %218 = vmatprep.subr.bf16.mxu0 0
    %219 = vmatpush1.bf16.msra.mxu0 0
    %220 = vmatprep.subr.bf16.mxu0 0
    %221 = vmatpush1.bf16.msra.mxu0 0
    %222 = vmatprep.subr.bf16.mxu0 0
    %223 = vmatpush1.bf16.msra.mxu0 %v199
    %224 = vmatprep.subr.bf16.mxu0 0
    %225 = vmatpush2.bf16.msra.mxu0 0
    %226 = vmatprep.subr.bf16.mxu0 0
    %227 = vmatpush2.bf16.msra.mxu0 0
    %228 = vmatprep.subr.bf16.mxu0 0
    %229 = vmatpush2.bf16.msra.mxu0 0
    %230 = vmatprep.subr.bf16.mxu0 0
    %231 = vmatpush2.bf16.msra.mxu0 0
    %232 = vmatprep.subr.bf16.mxu0 0
    %233 = vmatpush2.bf16.msra.mxu0 0
    %234 = vmatprep.subr.bf16.mxu0 0
    %235 = vmatpush2.bf16.msra.mxu0 0
    %236 = vmatprep.subr.bf16.mxu0 0
    %237 = vmatpush2.bf16.msra.mxu0 0
    %238 = vmatprep.subr.bf16.mxu0 0
    %239 = vmatpush2.bf16.msra.mxu0 0
    %240 = vmatprep.mubr.bf16.mxu0 0
    %241 = vmatmul.mubr.bf16.gmra.mxu0 %v206
    %v242 = vpop.f32.mrf.mxu0
    %v243 = vadd.f32 %v202, %v242
    %v244 = vpop.f32.mrf.mxu0
    %v245 = vpop.f32.mrf.mxu0
    %v246 = vadd.f32 %v202, %v245
    %v247 = vpop.f32.mrf.mxu0
    %248 = vdwg.mxu0
    %v249 = vpack.c.bf16 %v179, %v176
    %v250 = vpack.c.bf16 %v187, %v184
    %v251 = vpack.c.bf16 %v246, %v243
    %254 = vrot.lane.b32.xlu0 %v249, 120
    %v255 = vpop.permute.xlu0 %254
    %256 = vrot.lane.b32.xlu0 %v250, 120
    %v257 = vpop.permute.xlu0 %256
    %258 = vrot.lane.b32.xlu0 %v249, 112
    %v259 = vpop.permute.xlu0 %258
    %260 = vrot.lane.b32.xlu0 %v250, 112
    %v261 = vpop.permute.xlu0 %260
    %262 = vrot.lane.b32.xlu0 %v249, 104
    %v263 = vpop.permute.xlu0 %262
    %264 = vrot.lane.b32.xlu0 %v250, 104
    %v265 = vpop.permute.xlu0 %264
    %v267 = vunpack.c.l.b16 %v251
    %v268 = vunpack.c.h.b16 %v251
    %v269 = vpack.c.b16 %v267, %v267
    %v270 = vpack.c.b16 %v268, %v268
    %271 = vrot.lane.b32.xlu0 %v269, 120
    %v272 = vpop.permute.xlu0 %271
    %273 = vrot.lane.b32.xlu0 %v270, 120
    %v274 = vpop.permute.xlu0 %273
    %275 = vrot.lane.b32.xlu0 %v269, 112
    %v276 = vpop.permute.xlu0 %275
    %277 = vrot.lane.b32.xlu0 %v270, 112
    %v278 = vpop.permute.xlu0 %277
    %279 = vrot.lane.b32.xlu0 %v269, 104
    %v280 = vpop.permute.xlu0 %279
    %281 = vrot.lane.b32.xlu0 %v270, 104
    %v282 = vpop.permute.xlu0 %281
    %vm283 = vcmask 64512
    %v285 = vsel %vm283, %v249, 0
    %v288 = vsel %vm283, %v269, 0
    %290 = vmatprep.subr.bf16.mxu0 0
    %291 = vmatpush1.bf16.xpose.msra.mxu0 0
    %292 = vmatprep.subr.bf16.mxu0 0
    %293 = vmatpush1.bf16.xpose.msra.mxu0 0
    %294 = vmatprep.subr.bf16.mxu0 0
    %295 = vmatpush1.bf16.xpose.msra.mxu0 0
    %296 = vmatprep.subr.bf16.mxu0 0
    %297 = vmatpush1.bf16.xpose.msra.mxu0 0
    %298 = vmatprep.subr.bf16.mxu0 0
    %299 = vmatpush1.bf16.xpose.msra.mxu0 0
    %300 = vmatprep.subr.bf16.mxu0 0
    %301 = vmatpush1.bf16.xpose.msra.mxu0 0
    %302 = vmatprep.subr.bf16.mxu0 0
    %303 = vmatpush1.bf16.xpose.msra.mxu0 0
    %304 = vmatprep.subr.bf16.mxu0 0
    %305 = vmatpush1.bf16.xpose.msra.mxu0 %v288
    %306 = vmatprep.subr.bf16.mxu0 0
    %307 = vmatpush2.bf16.xpose.msra.mxu0 0
    %308 = vmatprep.subr.bf16.mxu0 0
    %309 = vmatpush2.bf16.xpose.msra.mxu0 0
    %310 = vmatprep.subr.bf16.mxu0 0
    %311 = vmatpush2.bf16.xpose.msra.mxu0 0
    %312 = vmatprep.subr.bf16.mxu0 0
    %313 = vmatpush2.bf16.xpose.msra.mxu0 0
    %314 = vmatprep.subr.bf16.mxu0 0
    %315 = vmatpush2.bf16.xpose.msra.mxu0 0
    %316 = vmatprep.subr.bf16.mxu0 0
    %317 = vmatpush2.bf16.xpose.msra.mxu0 0
    %318 = vmatprep.subr.bf16.mxu0 0
    %319 = vmatpush2.bf16.xpose.msra.mxu0 0
    %320 = vmatprep.subr.bf16.mxu0 0
    %321 = vmatpush2.bf16.xpose.msra.mxu0 0
    %322 = vmatprep.mubr.bf16.mxu0 0
    %323 = vmatmul.mubr.bf16.gmra.mxu0 %v285
    %v324 = vpop.f32.mrf.mxu0
    %v325 = vadd.f32 0.0, %v324
    %v326 = vpop.f32.mrf.mxu0
    %v327 = vpop.f32.mrf.mxu0
    %v328 = vadd.f32 0.0, %v327
    %v329 = vpop.f32.mrf.mxu0
    %330 = vdwg.mxu0
    %v332 = vsel %vm283, %v250, 0
    %v335 = vsel %vm283, %v270, 0
    %337 = vmatprep.subr.bf16.mxu0 0
    %338 = vmatpush1.bf16.xpose.msra.mxu0 0
    %339 = vmatprep.subr.bf16.mxu0 0
    %340 = vmatpush1.bf16.xpose.msra.mxu0 0
    %341 = vmatprep.subr.bf16.mxu0 0
    %342 = vmatpush1.bf16.xpose.msra.mxu0 0
    %343 = vmatprep.subr.bf16.mxu0 0
    %344 = vmatpush1.bf16.xpose.msra.mxu0 0
    %345 = vmatprep.subr.bf16.mxu0 0
    %346 = vmatpush1.bf16.xpose.msra.mxu0 0
    %347 = vmatprep.subr.bf16.mxu0 0
    %348 = vmatpush1.bf16.xpose.msra.mxu0 0
    %349 = vmatprep.subr.bf16.mxu0 0
    %350 = vmatpush1.bf16.xpose.msra.mxu0 0
    %351 = vmatprep.subr.bf16.mxu0 0
    %352 = vmatpush1.bf16.xpose.msra.mxu0 %v335
    %353 = vmatprep.subr.bf16.mxu0 0
    %354 = vmatpush2.bf16.xpose.msra.mxu0 0
    %355 = vmatprep.subr.bf16.mxu0 0
    %356 = vmatpush2.bf16.xpose.msra.mxu0 0
    %357 = vmatprep.subr.bf16.mxu0 0
    %358 = vmatpush2.bf16.xpose.msra.mxu0 0
    %359 = vmatprep.subr.bf16.mxu0 0
    %360 = vmatpush2.bf16.xpose.msra.mxu0 0
    %361 = vmatprep.subr.bf16.mxu0 0
    %362 = vmatpush2.bf16.xpose.msra.mxu0 0
    %363 = vmatprep.subr.bf16.mxu0 0
    %364 = vmatpush2.bf16.xpose.msra.mxu0 0
    %365 = vmatprep.subr.bf16.mxu0 0
    %366 = vmatpush2.bf16.xpose.msra.mxu0 0
    %367 = vmatprep.subr.bf16.mxu0 0
    %368 = vmatpush2.bf16.xpose.msra.mxu0 0
    %369 = vmatprep.mubr.bf16.mxu0 0
    %370 = vmatmul.mubr.bf16.gmra.mxu0 %v332
    %v371 = vpop.f32.mrf.mxu0
    %v372 = vadd.f32 0.0, %v371
    %v373 = vpop.f32.mrf.mxu0
    %v374 = vpop.f32.mrf.mxu0
    %v375 = vadd.f32 0.0, %v374
    %v376 = vpop.f32.mrf.mxu0
    %377 = vdwg.mxu0
    %v379 = vsel %vm283, %v255, 0
    %v382 = vsel %vm283, %v272, 0
    %384 = vmatprep.subr.bf16.mxu0 0
    %385 = vmatpush1.bf16.xpose.msra.mxu0 0
    %386 = vmatprep.subr.bf16.mxu0 0
    %387 = vmatpush1.bf16.xpose.msra.mxu0 0
    %388 = vmatprep.subr.bf16.mxu0 0
    %389 = vmatpush1.bf16.xpose.msra.mxu0 0
    %390 = vmatprep.subr.bf16.mxu0 0
    %391 = vmatpush1.bf16.xpose.msra.mxu0 0
    %392 = vmatprep.subr.bf16.mxu0 0
    %393 = vmatpush1.bf16.xpose.msra.mxu0 0
    %394 = vmatprep.subr.bf16.mxu0 0
    %395 = vmatpush1.bf16.xpose.msra.mxu0 0
    %396 = vmatprep.subr.bf16.mxu0 0
    %397 = vmatpush1.bf16.xpose.msra.mxu0 0
    %398 = vmatprep.subr.bf16.mxu0 0
    %399 = vmatpush1.bf16.xpose.msra.mxu0 %v382
    %400 = vmatprep.subr.bf16.mxu0 0
    %401 = vmatpush2.bf16.xpose.msra.mxu0 0
    %402 = vmatprep.subr.bf16.mxu0 0
    %403 = vmatpush2.bf16.xpose.msra.mxu0 0
    %404 = vmatprep.subr.bf16.mxu0 0
    %405 = vmatpush2.bf16.xpose.msra.mxu0 0
    %406 = vmatprep.subr.bf16.mxu0 0
    %407 = vmatpush2.bf16.xpose.msra.mxu0 0
    %408 = vmatprep.subr.bf16.mxu0 0
    %409 = vmatpush2.bf16.xpose.msra.mxu0 0
    %410 = vmatprep.subr.bf16.mxu0 0
    %411 = vmatpush2.bf16.xpose.msra.mxu0 0
    %412 = vmatprep.subr.bf16.mxu0 0
    %413 = vmatpush2.bf16.xpose.msra.mxu0 0
    %414 = vmatprep.subr.bf16.mxu0 0
    %415 = vmatpush2.bf16.xpose.msra.mxu0 0
    %416 = vmatprep.mubr.bf16.mxu0 0
    %417 = vmatmul.mubr.bf16.gmra.mxu0 %v379
    %v418 = vpop.f32.mrf.mxu0
    %v419 = vadd.f32 0.0, %v418
    %v420 = vpop.f32.mrf.mxu0
    %v421 = vpop.f32.mrf.mxu0
    %v422 = vadd.f32 0.0, %v421
    %v423 = vpop.f32.mrf.mxu0
    %424 = vdwg.mxu0
    %v426 = vsel %vm283, %v257, 0
    %v429 = vsel %vm283, %v274, 0
    %431 = vmatprep.subr.bf16.mxu0 0
    %432 = vmatpush1.bf16.xpose.msra.mxu0 0
    %433 = vmatprep.subr.bf16.mxu0 0
    %434 = vmatpush1.bf16.xpose.msra.mxu0 0
    %435 = vmatprep.subr.bf16.mxu0 0
    %436 = vmatpush1.bf16.xpose.msra.mxu0 0
    %437 = vmatprep.subr.bf16.mxu0 0
    %438 = vmatpush1.bf16.xpose.msra.mxu0 0
    %439 = vmatprep.subr.bf16.mxu0 0
    %440 = vmatpush1.bf16.xpose.msra.mxu0 0
    %441 = vmatprep.subr.bf16.mxu0 0
    %442 = vmatpush1.bf16.xpose.msra.mxu0 0
    %443 = vmatprep.subr.bf16.mxu0 0
    %444 = vmatpush1.bf16.xpose.msra.mxu0 0
    %445 = vmatprep.subr.bf16.mxu0 0
    %446 = vmatpush1.bf16.xpose.msra.mxu0 %v429
    %447 = vmatprep.subr.bf16.mxu0 0
    %448 = vmatpush2.bf16.xpose.msra.mxu0 0
    %449 = vmatprep.subr.bf16.mxu0 0
    %450 = vmatpush2.bf16.xpose.msra.mxu0 0
    %451 = vmatprep.subr.bf16.mxu0 0
    %452 = vmatpush2.bf16.xpose.msra.mxu0 0
    %453 = vmatprep.subr.bf16.mxu0 0
    %454 = vmatpush2.bf16.xpose.msra.mxu0 0
    %455 = vmatprep.subr.bf16.mxu0 0
    %456 = vmatpush2.bf16.xpose.msra.mxu0 0
    %457 = vmatprep.subr.bf16.mxu0 0
    %458 = vmatpush2.bf16.xpose.msra.mxu0 0
    %459 = vmatprep.subr.bf16.mxu0 0
    %460 = vmatpush2.bf16.xpose.msra.mxu0 0
    %461 = vmatprep.subr.bf16.mxu0 0
    %462 = vmatpush2.bf16.xpose.msra.mxu0 0
    %463 = vmatprep.mubr.bf16.mxu0 0
    %464 = vmatmul.mubr.bf16.gmra.mxu0 %v426
    %v465 = vpop.f32.mrf.mxu0
    %v466 = vadd.f32 0.0, %v465
    %v467 = vpop.f32.mrf.mxu0
    %v468 = vpop.f32.mrf.mxu0
    %v469 = vadd.f32 0.0, %v468
    %v470 = vpop.f32.mrf.mxu0
    %471 = vdwg.mxu0
    %v473 = vsel %vm283, %v259, 0
    %v476 = vsel %vm283, %v276, 0
    %478 = vmatprep.subr.bf16.mxu0 0
    %479 = vmatpush1.bf16.xpose.msra.mxu0 0
    %480 = vmatprep.subr.bf16.mxu0 0
    %481 = vmatpush1.bf16.xpose.msra.mxu0 0
    %482 = vmatprep.subr.bf16.mxu0 0
    %483 = vmatpush1.bf16.xpose.msra.mxu0 0
    %484 = vmatprep.subr.bf16.mxu0 0
    %485 = vmatpush1.bf16.xpose.msra.mxu0 0
    %486 = vmatprep.subr.bf16.mxu0 0
    %487 = vmatpush1.bf16.xpose.msra.mxu0 0
    %488 = vmatprep.subr.bf16.mxu0 0
    %489 = vmatpush1.bf16.xpose.msra.mxu0 0
    %490 = vmatprep.subr.bf16.mxu0 0
    %491 = vmatpush1.bf16.xpose.msra.mxu0 0
    %492 = vmatprep.subr.bf16.mxu0 0
    %493 = vmatpush1.bf16.xpose.msra.mxu0 %v476
    %494 = vmatprep.subr.bf16.mxu0 0
    %495 = vmatpush2.bf16.xpose.msra.mxu0 0
    %496 = vmatprep.subr.bf16.mxu0 0
    %497 = vmatpush2.bf16.xpose.msra.mxu0 0
    %498 = vmatprep.subr.bf16.mxu0 0
    %499 = vmatpush2.bf16.xpose.msra.mxu0 0
    %500 = vmatprep.subr.bf16.mxu0 0
    %501 = vmatpush2.bf16.xpose.msra.mxu0 0
    %502 = vmatprep.subr.bf16.mxu0 0
    %503 = vmatpush2.bf16.xpose.msra.mxu0 0
    %504 = vmatprep.subr.bf16.mxu0 0
    %505 = vmatpush2.bf16.xpose.msra.mxu0 0
    %506 = vmatprep.subr.bf16.mxu0 0
    %507 = vmatpush2.bf16.xpose.msra.mxu0 0
    %508 = vmatprep.subr.bf16.mxu0 0
    %509 = vmatpush2.bf16.xpose.msra.mxu0 0
    %510 = vmatprep.mubr.bf16.mxu0 0
    %511 = vmatmul.mubr.bf16.gmra.mxu0 %v473
    %v512 = vpop.f32.mrf.mxu0
    %v513 = vadd.f32 0.0, %v512
    %v514 = vpop.f32.mrf.mxu0
    %v515 = vpop.f32.mrf.mxu0
    %v516 = vadd.f32 0.0, %v515
    %v517 = vpop.f32.mrf.mxu0
    %518 = vdwg.mxu0
    %v520 = vsel %vm283, %v261, 0
    %v523 = vsel %vm283, %v278, 0
    %525 = vmatprep.subr.bf16.mxu0 0
    %526 = vmatpush1.bf16.xpose.msra.mxu0 0
    %527 = vmatprep.subr.bf16.mxu0 0
    %528 = vmatpush1.bf16.xpose.msra.mxu0 0
    %529 = vmatprep.subr.bf16.mxu0 0
    %530 = vmatpush1.bf16.xpose.msra.mxu0 0
    %531 = vmatprep.subr.bf16.mxu0 0
    %532 = vmatpush1.bf16.xpose.msra.mxu0 0
    %533 = vmatprep.subr.bf16.mxu0 0
    %534 = vmatpush1.bf16.xpose.msra.mxu0 0
    %535 = vmatprep.subr.bf16.mxu0 0
    %536 = vmatpush1.bf16.xpose.msra.mxu0 0
    %537 = vmatprep.subr.bf16.mxu0 0
    %538 = vmatpush1.bf16.xpose.msra.mxu0 0
    %539 = vmatprep.subr.bf16.mxu0 0
    %540 = vmatpush1.bf16.xpose.msra.mxu0 %v523
    %541 = vmatprep.subr.bf16.mxu0 0
    %542 = vmatpush2.bf16.xpose.msra.mxu0 0
    %543 = vmatprep.subr.bf16.mxu0 0
    %544 = vmatpush2.bf16.xpose.msra.mxu0 0
    %545 = vmatprep.subr.bf16.mxu0 0
    %546 = vmatpush2.bf16.xpose.msra.mxu0 0
    %547 = vmatprep.subr.bf16.mxu0 0
    %548 = vmatpush2.bf16.xpose.msra.mxu0 0
    %549 = vmatprep.subr.bf16.mxu0 0
    %550 = vmatpush2.bf16.xpose.msra.mxu0 0
    %551 = vmatprep.subr.bf16.mxu0 0
    %552 = vmatpush2.bf16.xpose.msra.mxu0 0
    %553 = vmatprep.subr.bf16.mxu0 0
    %554 = vmatpush2.bf16.xpose.msra.mxu0 0
    %555 = vmatprep.subr.bf16.mxu0 0
    %556 = vmatpush2.bf16.xpose.msra.mxu0 0
    %557 = vmatprep.mubr.bf16.mxu0 0
    %558 = vmatmul.mubr.bf16.gmra.mxu0 %v520
    %v559 = vpop.f32.mrf.mxu0
    %v560 = vadd.f32 0.0, %v559
    %v561 = vpop.f32.mrf.mxu0
    %v562 = vpop.f32.mrf.mxu0
    %v563 = vadd.f32 0.0, %v562
    %v564 = vpop.f32.mrf.mxu0
    %565 = vdwg.mxu0
    %v567 = vsel %vm283, %v263, 0
    %v570 = vsel %vm283, %v280, 0
    %572 = vmatprep.subr.bf16.mxu0 0
    %573 = vmatpush1.bf16.xpose.msra.mxu0 0
    %574 = vmatprep.subr.bf16.mxu0 0
    %575 = vmatpush1.bf16.xpose.msra.mxu0 0
    %576 = vmatprep.subr.bf16.mxu0 0
    %577 = vmatpush1.bf16.xpose.msra.mxu0 0
    %578 = vmatprep.subr.bf16.mxu0 0
    %579 = vmatpush1.bf16.xpose.msra.mxu0 0
    %580 = vmatprep.subr.bf16.mxu0 0
    %581 = vmatpush1.bf16.xpose.msra.mxu0 0
    %582 = vmatprep.subr.bf16.mxu0 0
    %583 = vmatpush1.bf16.xpose.msra.mxu0 0
    %584 = vmatprep.subr.bf16.mxu0 0
    %585 = vmatpush1.bf16.xpose.msra.mxu0 0
    %586 = vmatprep.subr.bf16.mxu0 0
    %587 = vmatpush1.bf16.xpose.msra.mxu0 %v570
    %588 = vmatprep.subr.bf16.mxu0 0
    %589 = vmatpush2.bf16.xpose.msra.mxu0 0
    %590 = vmatprep.subr.bf16.mxu0 0
    %591 = vmatpush2.bf16.xpose.msra.mxu0 0
    %592 = vmatprep.subr.bf16.mxu0 0
    %593 = vmatpush2.bf16.xpose.msra.mxu0 0
    %594 = vmatprep.subr.bf16.mxu0 0
    %595 = vmatpush2.bf16.xpose.msra.mxu0 0
    %596 = vmatprep.subr.bf16.mxu0 0
    %597 = vmatpush2.bf16.xpose.msra.mxu0 0
    %598 = vmatprep.subr.bf16.mxu0 0
    %599 = vmatpush2.bf16.xpose.msra.mxu0 0
    %600 = vmatprep.subr.bf16.mxu0 0
    %601 = vmatpush2.bf16.xpose.msra.mxu0 0
    %602 = vmatprep.subr.bf16.mxu0 0
    %603 = vmatpush2.bf16.xpose.msra.mxu0 0
    %604 = vmatprep.mubr.bf16.mxu0 0
    %605 = vmatmul.mubr.bf16.gmra.mxu0 %v567
    %v606 = vpop.f32.mrf.mxu0
    %v607 = vadd.f32 0.0, %v606
    %v608 = vpop.f32.mrf.mxu0
    %v609 = vpop.f32.mrf.mxu0
    %v610 = vadd.f32 0.0, %v609
    %v611 = vpop.f32.mrf.mxu0
    %612 = vdwg.mxu0
    %v614 = vsel %vm283, %v265, 0
    %v617 = vsel %vm283, %v282, 0
    %619 = vmatprep.subr.bf16.mxu0 0
    %620 = vmatpush1.bf16.xpose.msra.mxu0 0
    %621 = vmatprep.subr.bf16.mxu0 0
    %622 = vmatpush1.bf16.xpose.msra.mxu0 0
    %623 = vmatprep.subr.bf16.mxu0 0
    %624 = vmatpush1.bf16.xpose.msra.mxu0 0
    %625 = vmatprep.subr.bf16.mxu0 0
    %626 = vmatpush1.bf16.xpose.msra.mxu0 0
    %627 = vmatprep.subr.bf16.mxu0 0
    %628 = vmatpush1.bf16.xpose.msra.mxu0 0
    %629 = vmatprep.subr.bf16.mxu0 0
    %630 = vmatpush1.bf16.xpose.msra.mxu0 0
    %631 = vmatprep.subr.bf16.mxu0 0
    %632 = vmatpush1.bf16.xpose.msra.mxu0 0
    %633 = vmatprep.subr.bf16.mxu0 0
    %634 = vmatpush1.bf16.xpose.msra.mxu0 %v617
    %635 = vmatprep.subr.bf16.mxu0 0
    %636 = vmatpush2.bf16.xpose.msra.mxu0 0
    %637 = vmatprep.subr.bf16.mxu0 0
    %638 = vmatpush2.bf16.xpose.msra.mxu0 0
    %639 = vmatprep.subr.bf16.mxu0 0
    %640 = vmatpush2.bf16.xpose.msra.mxu0 0
    %641 = vmatprep.subr.bf16.mxu0 0
    %642 = vmatpush2.bf16.xpose.msra.mxu0 0
    %643 = vmatprep.subr.bf16.mxu0 0
    %644 = vmatpush2.bf16.xpose.msra.mxu0 0
    %645 = vmatprep.subr.bf16.mxu0 0
    %646 = vmatpush2.bf16.xpose.msra.mxu0 0
    %647 = vmatprep.subr.bf16.mxu0 0
    %648 = vmatpush2.bf16.xpose.msra.mxu0 0
    %649 = vmatprep.subr.bf16.mxu0 0
    %650 = vmatpush2.bf16.xpose.msra.mxu0 0
    %651 = vmatprep.mubr.bf16.mxu0 0
    %652 = vmatmul.mubr.bf16.gmra.mxu0 %v614
    %v653 = vpop.f32.mrf.mxu0
    %v654 = vadd.f32 0.0, %v653
    %v655 = vpop.f32.mrf.mxu0
    %v656 = vpop.f32.mrf.mxu0
    %v657 = vadd.f32 0.0, %v656
    %v658 = vpop.f32.mrf.mxu0
    %659 = vdwg.mxu0
    %v660 = vsel %vm283, %v325, -inf
    %661 = vmax.xlane.f32.xlu0 %v660
    %v662 = vpop.xlane.xlu0 %661
    %v663 = vsel %vm283, %v328, -inf
    %664 = vmax.xlane.f32.xlu0 %v663
    %v665 = vpop.xlane.xlu0 %664
    %v666 = vsel %vm283, %v372, -inf
    %667 = vmax.xlane.f32.xlu0 %v666
    %v668 = vpop.xlane.xlu0 %667
    %v669 = vsel %vm283, %v375, -inf
    %670 = vmax.xlane.f32.xlu0 %v669
    %v671 = vpop.xlane.xlu0 %670
    %v672 = vsel %vm283, %v419, -inf
    %673 = vmax.xlane.f32.xlu0 %v672
    %v674 = vpop.xlane.xlu0 %673
    %v675 = vsel %vm283, %v422, -inf
    %676 = vmax.xlane.f32.xlu0 %v675
    %v677 = vpop.xlane.xlu0 %676
    %v678 = vsel %vm283, %v466, -inf
    %679 = vmax.xlane.f32.xlu0 %v678
    %v680 = vpop.xlane.xlu0 %679
    %v681 = vsel %vm283, %v469, -inf
    %682 = vmax.xlane.f32.xlu0 %v681
    %v683 = vpop.xlane.xlu0 %682
    %v684 = vsel %vm283, %v513, -inf
    %685 = vmax.xlane.f32.xlu0 %v684
    %v686 = vpop.xlane.xlu0 %685
    %v687 = vsel %vm283, %v516, -inf
    %688 = vmax.xlane.f32.xlu0 %v687
    %v689 = vpop.xlane.xlu0 %688
    %v690 = vsel %vm283, %v560, -inf
    %691 = vmax.xlane.f32.xlu0 %v690
    %v692 = vpop.xlane.xlu0 %691
    %v693 = vsel %vm283, %v563, -inf
    %694 = vmax.xlane.f32.xlu0 %v693
    %v695 = vpop.xlane.xlu0 %694
    %v696 = vsel %vm283, %v607, -inf
    %697 = vmax.xlane.f32.xlu0 %v696
    %v698 = vpop.xlane.xlu0 %697
    %v699 = vsel %vm283, %v610, -inf
    %700 = vmax.xlane.f32.xlu0 %v699
    %v701 = vpop.xlane.xlu0 %700
    %v702 = vsel %vm283, %v654, -inf
    %703 = vmax.xlane.f32.xlu0 %v702
    %v704 = vpop.xlane.xlu0 %703
    %v705 = vsel %vm283, %v657, -inf
    %706 = vmax.xlane.f32.xlu0 %v705
    %v707 = vpop.xlane.xlu0 %706
    %v708 = vsub.f32 %v325, %v662
    %v709 = vsub.f32 %v328, %v665
    %v710 = vsub.f32 %v372, %v668
    %v711 = vsub.f32 %v375, %v671
    %v712 = vsub.f32 %v419, %v674
    %v713 = vsub.f32 %v422, %v677
    %v714 = vsub.f32 %v466, %v680
    %v715 = vsub.f32 %v469, %v683
    %v716 = vsub.f32 %v513, %v686
    %v717 = vsub.f32 %v516, %v689
    %v718 = vsub.f32 %v560, %v692
    %v719 = vsub.f32 %v563, %v695
    %v720 = vsub.f32 %v607, %v698
    %v721 = vsub.f32 %v610, %v701
    %v722 = vsub.f32 %v654, %v704
    %v723 = vsub.f32 %v657, %v707
    %v724 = vmul.f32 %v708, 1.442695
    %v725 = vpow.pop %v724
    %v726 = vmul.f32 %v709, 1.442695
    %v727 = vpow.pop %v726
    %v728 = vmul.f32 %v710, 1.442695
    %v729 = vpow.pop %v728
    %v730 = vmul.f32 %v711, 1.442695
    %v731 = vpow.pop %v730
    %v732 = vmul.f32 %v712, 1.442695
    %v733 = vpow.pop %v732
    %v734 = vmul.f32 %v713, 1.442695
    %v735 = vpow.pop %v734
    %v736 = vmul.f32 %v714, 1.442695
    %v737 = vpow.pop %v736
    %v738 = vmul.f32 %v715, 1.442695
    %v739 = vpow.pop %v738
    %v740 = vmul.f32 %v716, 1.442695
    %v741 = vpow.pop %v740
    %v742 = vmul.f32 %v717, 1.442695
    %v743 = vpow.pop %v742
    %v744 = vmul.f32 %v718, 1.442695
    %v745 = vpow.pop %v744
    %v746 = vmul.f32 %v719, 1.442695
    %v747 = vpow.pop %v746
    %v748 = vmul.f32 %v720, 1.442695
    %v749 = vpow.pop %v748
    %v750 = vmul.f32 %v721, 1.442695
    %v751 = vpow.pop %v750
    %v752 = vmul.f32 %v722, 1.442695
    %v753 = vpow.pop %v752
    %v754 = vmul.f32 %v723, 1.442695
    %v755 = vpow.pop %v754
    %v756 = vsel %vm283, %v725, 0.0
    %757 = vadd.xlane.f32.xlu0 %v756
    %v758 = vpop.xlane.xlu0 %757
    %v759 = vsel %vm283, %v727, 0.0
    %760 = vadd.xlane.f32.xlu0 %v759
    %v761 = vpop.xlane.xlu0 %760
    %v762 = vsel %vm283, %v729, 0.0
    %763 = vadd.xlane.f32.xlu0 %v762
    %v764 = vpop.xlane.xlu0 %763
    %v765 = vsel %vm283, %v731, 0.0
    %766 = vadd.xlane.f32.xlu0 %v765
    %v767 = vpop.xlane.xlu0 %766
    %v768 = vsel %vm283, %v733, 0.0
    %769 = vadd.xlane.f32.xlu0 %v768
    %v770 = vpop.xlane.xlu0 %769
    %v771 = vsel %vm283, %v735, 0.0
    %772 = vadd.xlane.f32.xlu0 %v771
    %v773 = vpop.xlane.xlu0 %772
    %v774 = vsel %vm283, %v737, 0.0
    %775 = vadd.xlane.f32.xlu0 %v774
    %v776 = vpop.xlane.xlu0 %775
    %v777 = vsel %vm283, %v739, 0.0
    %778 = vadd.xlane.f32.xlu0 %v777
    %v779 = vpop.xlane.xlu0 %778
    %v780 = vsel %vm283, %v741, 0.0
    %781 = vadd.xlane.f32.xlu0 %v780
    %v782 = vpop.xlane.xlu0 %781
    %v783 = vsel %vm283, %v743, 0.0
    %784 = vadd.xlane.f32.xlu0 %v783
    %v785 = vpop.xlane.xlu0 %784
    %v786 = vsel %vm283, %v745, 0.0
    %787 = vadd.xlane.f32.xlu0 %v786
    %v788 = vpop.xlane.xlu0 %787
    %v789 = vsel %vm283, %v747, 0.0
    %790 = vadd.xlane.f32.xlu0 %v789
    %v791 = vpop.xlane.xlu0 %790
    %v792 = vsel %vm283, %v749, 0.0
    %793 = vadd.xlane.f32.xlu0 %v792
    %v794 = vpop.xlane.xlu0 %793
    %v795 = vsel %vm283, %v751, 0.0
    %796 = vadd.xlane.f32.xlu0 %v795
    %v797 = vpop.xlane.xlu0 %796
    %v798 = vsel %vm283, %v753, 0.0
    %799 = vadd.xlane.f32.xlu0 %v798
    %v800 = vpop.xlane.xlu0 %799
    %v801 = vsel %vm283, %v755, 0.0
    %802 = vadd.xlane.f32.xlu0 %v801
    %v803 = vpop.xlane.xlu0 %802
    %v804 = vrcp.pop %v758
    %v805 = vrcp.pop %v761
    %v806 = vrcp.pop %v764
    %v807 = vrcp.pop %v767
    %v808 = vrcp.pop %v770
    %v809 = vrcp.pop %v773
    %v810 = vrcp.pop %v776
    %v811 = vrcp.pop %v779
    %v812 = vrcp.pop %v782
    %v813 = vrcp.pop %v785
    %v814 = vrcp.pop %v788
    %v815 = vrcp.pop %v791
    %v816 = vrcp.pop %v794
    %v817 = vrcp.pop %v797
    %v818 = vrcp.pop %v800
    %v819 = vrcp.pop %v803
    %v820 = vmul.f32 %v725, %v804
    %v821 = vmul.f32 %v727, %v805
    %v822 = vmul.f32 %v729, %v806
    %v823 = vmul.f32 %v731, %v807
    %v824 = vmul.f32 %v733, %v808
    %v825 = vmul.f32 %v735, %v809
    %v826 = vmul.f32 %v737, %v810
    %v827 = vmul.f32 %v739, %v811
    %v828 = vmul.f32 %v741, %v812
    %v829 = vmul.f32 %v743, %v813
    %v830 = vmul.f32 %v745, %v814
    %v831 = vmul.f32 %v747, %v815
    %v832 = vmul.f32 %v749, %v816
    %v833 = vmul.f32 %v751, %v817
    %v834 = vmul.f32 %v753, %v818
    %v835 = vmul.f32 %v755, %v819
    %v836 = vpack.c.bf16 %v821, %v820
    %v837 = vpack.c.bf16 %v823, %v822
    %v838 = vpack.c.bf16 %v825, %v824
    %v839 = vpack.c.bf16 %v827, %v826
    %v840 = vpack.c.bf16 %v829, %v828
    %v841 = vpack.c.bf16 %v831, %v830
    %v842 = vpack.c.bf16 %v833, %v832
    %v843 = vpack.c.bf16 %v835, %v834
    %844 = vrot.lane.b32.xlu0 %v269, 96
    %v845 = vpop.permute.xlu0 %844
    %v847 = vsel %vm283, %v836, 0
    %vm849 = vcmask 1043456
    %v851 = vsel %vm849, %v845, 0
    %853 = vmatprep.subr.bf16.mxu0 0
    %854 = vmatpush1.bf16.msra.mxu0 0
    %855 = vmatprep.subr.bf16.mxu0 0
    %856 = vmatpush1.bf16.msra.mxu0 0
    %857 = vmatprep.subr.bf16.mxu0 0
    %858 = vmatpush1.bf16.msra.mxu0 0
    %859 = vmatprep.subr.bf16.mxu0 0
    %860 = vmatpush1.bf16.msra.mxu0 0
    %861 = vmatprep.subr.bf16.mxu0 0
    %862 = vmatpush1.bf16.msra.mxu0 0
    %863 = vmatprep.subr.bf16.mxu0 0
    %864 = vmatpush1.bf16.msra.mxu0 0
    %865 = vmatprep.subr.bf16.mxu0 0
    %866 = vmatpush1.bf16.msra.mxu0 0
    %867 = vmatprep.subr.bf16.mxu0 0
    %868 = vmatpush1.bf16.msra.mxu0 %v851
    %869 = vmatprep.subr.bf16.mxu0 0
    %870 = vmatpush2.bf16.msra.mxu0 0
    %871 = vmatprep.subr.bf16.mxu0 0
    %872 = vmatpush2.bf16.msra.mxu0 0
    %873 = vmatprep.subr.bf16.mxu0 0
    %874 = vmatpush2.bf16.msra.mxu0 0
    %875 = vmatprep.subr.bf16.mxu0 0
    %876 = vmatpush2.bf16.msra.mxu0 0
    %877 = vmatprep.subr.bf16.mxu0 0
    %878 = vmatpush2.bf16.msra.mxu0 0
    %879 = vmatprep.subr.bf16.mxu0 0
    %880 = vmatpush2.bf16.msra.mxu0 0
    %881 = vmatprep.subr.bf16.mxu0 0
    %882 = vmatpush2.bf16.msra.mxu0 0
    %883 = vmatprep.subr.bf16.mxu0 0
    %884 = vmatpush2.bf16.msra.mxu0 0
    %885 = vmatprep.mubr.bf16.mxu0 0
    %886 = vmatmul.mubr.bf16.gmra.mxu0 %v847
    %v887 = vpop.f32.mrf.mxu0
    %v888 = vadd.f32 0.0, %v887
    %v889 = vpop.f32.mrf.mxu0
    %v890 = vpop.f32.mrf.mxu0
    %v891 = vadd.f32 0.0, %v890
    %v892 = vpop.f32.mrf.mxu0
    %893 = vdwg.mxu0
    %894 = vrot.lane.b32.xlu0 %v270, 96
    %v895 = vpop.permute.xlu0 %894
    %v897 = vsel %vm283, %v837, 0
    %v900 = vsel %vm849, %v895, 0
    %902 = vmatprep.subr.bf16.mxu0 0
    %903 = vmatpush1.bf16.msra.mxu0 0
    %904 = vmatprep.subr.bf16.mxu0 0
    %905 = vmatpush1.bf16.msra.mxu0 0
    %906 = vmatprep.subr.bf16.mxu0 0
    %907 = vmatpush1.bf16.msra.mxu0 0
    %908 = vmatprep.subr.bf16.mxu0 0
    %909 = vmatpush1.bf16.msra.mxu0 0
    %910 = vmatprep.subr.bf16.mxu0 0
    %911 = vmatpush1.bf16.msra.mxu0 0
    %912 = vmatprep.subr.bf16.mxu0 0
    %913 = vmatpush1.bf16.msra.mxu0 0
    %914 = vmatprep.subr.bf16.mxu0 0
    %915 = vmatpush1.bf16.msra.mxu0 0
    %916 = vmatprep.subr.bf16.mxu0 0
    %917 = vmatpush1.bf16.msra.mxu0 %v900
    %918 = vmatprep.subr.bf16.mxu0 0
    %919 = vmatpush2.bf16.msra.mxu0 0
    %920 = vmatprep.subr.bf16.mxu0 0
    %921 = vmatpush2.bf16.msra.mxu0 0
    %922 = vmatprep.subr.bf16.mxu0 0
    %923 = vmatpush2.bf16.msra.mxu0 0
    %924 = vmatprep.subr.bf16.mxu0 0
    %925 = vmatpush2.bf16.msra.mxu0 0
    %926 = vmatprep.subr.bf16.mxu0 0
    %927 = vmatpush2.bf16.msra.mxu0 0
    %928 = vmatprep.subr.bf16.mxu0 0
    %929 = vmatpush2.bf16.msra.mxu0 0
    %930 = vmatprep.subr.bf16.mxu0 0
    %931 = vmatpush2.bf16.msra.mxu0 0
    %932 = vmatprep.subr.bf16.mxu0 0
    %933 = vmatpush2.bf16.msra.mxu0 0
    %934 = vmatprep.mubr.bf16.mxu0 0
    %935 = vmatmul.mubr.bf16.gmra.mxu0 %v897
    %v936 = vpop.f32.mrf.mxu0
    %v937 = vadd.f32 0.0, %v936
    %v938 = vpop.f32.mrf.mxu0
    %v939 = vpop.f32.mrf.mxu0
    %v940 = vadd.f32 0.0, %v939
    %v941 = vpop.f32.mrf.mxu0
    %942 = vdwg.mxu0
    %v943 = vunpack.c.l.b16 %v272
    %v944 = vpack.c.b16 %v943, %v943
    %945 = vrot.lane.b32.xlu0 %v944, 96
    %v946 = vpop.permute.xlu0 %945
    %v948 = vsel %vm283, %v838, 0
    %v951 = vsel %vm849, %v946, 0
    %953 = vmatprep.subr.bf16.mxu0 0
    %954 = vmatpush1.bf16.msra.mxu0 0
    %955 = vmatprep.subr.bf16.mxu0 0
    %956 = vmatpush1.bf16.msra.mxu0 0
    %957 = vmatprep.subr.bf16.mxu0 0
    %958 = vmatpush1.bf16.msra.mxu0 0
    %959 = vmatprep.subr.bf16.mxu0 0
    %960 = vmatpush1.bf16.msra.mxu0 0
    %961 = vmatprep.subr.bf16.mxu0 0
    %962 = vmatpush1.bf16.msra.mxu0 0
    %963 = vmatprep.subr.bf16.mxu0 0
    %964 = vmatpush1.bf16.msra.mxu0 0
    %965 = vmatprep.subr.bf16.mxu0 0
    %966 = vmatpush1.bf16.msra.mxu0 0
    %967 = vmatprep.subr.bf16.mxu0 0
    %968 = vmatpush1.bf16.msra.mxu0 %v951
    %969 = vmatprep.subr.bf16.mxu0 0
    %970 = vmatpush2.bf16.msra.mxu0 0
    %971 = vmatprep.subr.bf16.mxu0 0
    %972 = vmatpush2.bf16.msra.mxu0 0
    %973 = vmatprep.subr.bf16.mxu0 0
    %974 = vmatpush2.bf16.msra.mxu0 0
    %975 = vmatprep.subr.bf16.mxu0 0
    %976 = vmatpush2.bf16.msra.mxu0 0
    %977 = vmatprep.subr.bf16.mxu0 0
    %978 = vmatpush2.bf16.msra.mxu0 0
    %979 = vmatprep.subr.bf16.mxu0 0
    %980 = vmatpush2.bf16.msra.mxu0 0
    %981 = vmatprep.subr.bf16.mxu0 0
    %982 = vmatpush2.bf16.msra.mxu0 0
    %983 = vmatprep.subr.bf16.mxu0 0
    %984 = vmatpush2.bf16.msra.mxu0 0
    %985 = vmatprep.mubr.bf16.mxu0 0
    %986 = vmatmul.mubr.bf16.gmra.mxu0 %v948
    %v987 = vpop.f32.mrf.mxu0
    %v988 = vadd.f32 0.0, %v987
    %v989 = vpop.f32.mrf.mxu0
    %v990 = vpop.f32.mrf.mxu0
    %v991 = vadd.f32 0.0, %v990
    %v992 = vpop.f32.mrf.mxu0
    %993 = vdwg.mxu0
    %v994 = vunpack.c.l.b16 %v274
    %v995 = vpack.c.b16 %v994, %v994
    %996 = vrot.lane.b32.xlu0 %v995, 96
    %v997 = vpop.permute.xlu0 %996
    %v999 = vsel %vm283, %v839, 0
    %v1002 = vsel %vm849, %v997, 0
    %1004 = vmatprep.subr.bf16.mxu0 0
    %1005 = vmatpush1.bf16.msra.mxu0 0
    %1006 = vmatprep.subr.bf16.mxu0 0
    %1007 = vmatpush1.bf16.msra.mxu0 0
    %1008 = vmatprep.subr.bf16.mxu0 0
    %1009 = vmatpush1.bf16.msra.mxu0 0
    %1010 = vmatprep.subr.bf16.mxu0 0
    %1011 = vmatpush1.bf16.msra.mxu0 0
    %1012 = vmatprep.subr.bf16.mxu0 0
    %1013 = vmatpush1.bf16.msra.mxu0 0
    %1014 = vmatprep.subr.bf16.mxu0 0
    %1015 = vmatpush1.bf16.msra.mxu0 0
    %1016 = vmatprep.subr.bf16.mxu0 0
    %1017 = vmatpush1.bf16.msra.mxu0 0
    %1018 = vmatprep.subr.bf16.mxu0 0
    %1019 = vmatpush1.bf16.msra.mxu0 %v1002
    %1020 = vmatprep.subr.bf16.mxu0 0
    %1021 = vmatpush2.bf16.msra.mxu0 0
    %1022 = vmatprep.subr.bf16.mxu0 0
    %1023 = vmatpush2.bf16.msra.mxu0 0
    %1024 = vmatprep.subr.bf16.mxu0 0
    %1025 = vmatpush2.bf16.msra.mxu0 0
    %1026 = vmatprep.subr.bf16.mxu0 0
    %1027 = vmatpush2.bf16.msra.mxu0 0
    %1028 = vmatprep.subr.bf16.mxu0 0
    %1029 = vmatpush2.bf16.msra.mxu0 0
    %1030 = vmatprep.subr.bf16.mxu0 0
    %1031 = vmatpush2.bf16.msra.mxu0 0
    %1032 = vmatprep.subr.bf16.mxu0 0
    %1033 = vmatpush2.bf16.msra.mxu0 0
    %1034 = vmatprep.subr.bf16.mxu0 0
    %1035 = vmatpush2.bf16.msra.mxu0 0
    %1036 = vmatprep.mubr.bf16.mxu0 0
    %1037 = vmatmul.mubr.bf16.gmra.mxu0 %v999
    %v1038 = vpop.f32.mrf.mxu0
    %v1039 = vadd.f32 0.0, %v1038
    %v1040 = vpop.f32.mrf.mxu0
    %v1041 = vpop.f32.mrf.mxu0
    %v1042 = vadd.f32 0.0, %v1041
    %v1043 = vpop.f32.mrf.mxu0
    %1044 = vdwg.mxu0
    %v1045 = vunpack.c.l.b16 %v276
    %v1046 = vpack.c.b16 %v1045, %v1045
    %1047 = vrot.lane.b32.xlu0 %v1046, 96
    %v1048 = vpop.permute.xlu0 %1047
    %v1050 = vsel %vm283, %v840, 0
    %v1053 = vsel %vm849, %v1048, 0
    %1055 = vmatprep.subr.bf16.mxu0 0
    %1056 = vmatpush1.bf16.msra.mxu0 0
    %1057 = vmatprep.subr.bf16.mxu0 0
    %1058 = vmatpush1.bf16.msra.mxu0 0
    %1059 = vmatprep.subr.bf16.mxu0 0
    %1060 = vmatpush1.bf16.msra.mxu0 0
    %1061 = vmatprep.subr.bf16.mxu0 0
    %1062 = vmatpush1.bf16.msra.mxu0 0
    %1063 = vmatprep.subr.bf16.mxu0 0
    %1064 = vmatpush1.bf16.msra.mxu0 0
    %1065 = vmatprep.subr.bf16.mxu0 0
    %1066 = vmatpush1.bf16.msra.mxu0 0
    %1067 = vmatprep.subr.bf16.mxu0 0
    %1068 = vmatpush1.bf16.msra.mxu0 0
    %1069 = vmatprep.subr.bf16.mxu0 0
    %1070 = vmatpush1.bf16.msra.mxu0 %v1053
    %1071 = vmatprep.subr.bf16.mxu0 0
    %1072 = vmatpush2.bf16.msra.mxu0 0
    %1073 = vmatprep.subr.bf16.mxu0 0
    %1074 = vmatpush2.bf16.msra.mxu0 0
    %1075 = vmatprep.subr.bf16.mxu0 0
    %1076 = vmatpush2.bf16.msra.mxu0 0
    %1077 = vmatprep.subr.bf16.mxu0 0
    %1078 = vmatpush2.bf16.msra.mxu0 0
    %1079 = vmatprep.subr.bf16.mxu0 0
    %1080 = vmatpush2.bf16.msra.mxu0 0
    %1081 = vmatprep.subr.bf16.mxu0 0
    %1082 = vmatpush2.bf16.msra.mxu0 0
    %1083 = vmatprep.subr.bf16.mxu0 0
    %1084 = vmatpush2.bf16.msra.mxu0 0
    %1085 = vmatprep.subr.bf16.mxu0 0
    %1086 = vmatpush2.bf16.msra.mxu0 0
    %1087 = vmatprep.mubr.bf16.mxu0 0
    %1088 = vmatmul.mubr.bf16.gmra.mxu0 %v1050
    %v1089 = vpop.f32.mrf.mxu0
    %v1090 = vadd.f32 0.0, %v1089
    %v1091 = vpop.f32.mrf.mxu0
    %v1092 = vpop.f32.mrf.mxu0
    %v1093 = vadd.f32 0.0, %v1092
    %v1094 = vpop.f32.mrf.mxu0
    %1095 = vdwg.mxu0
    %v1096 = vunpack.c.l.b16 %v278
    %v1097 = vpack.c.b16 %v1096, %v1096
    %1098 = vrot.lane.b32.xlu0 %v1097, 96
    %v1099 = vpop.permute.xlu0 %1098
    %v1101 = vsel %vm283, %v841, 0
    %v1104 = vsel %vm849, %v1099, 0
    %1106 = vmatprep.subr.bf16.mxu0 0
    %1107 = vmatpush1.bf16.msra.mxu0 0
    %1108 = vmatprep.subr.bf16.mxu0 0
    %1109 = vmatpush1.bf16.msra.mxu0 0
    %1110 = vmatprep.subr.bf16.mxu0 0
    %1111 = vmatpush1.bf16.msra.mxu0 0
    %1112 = vmatprep.subr.bf16.mxu0 0
    %1113 = vmatpush1.bf16.msra.mxu0 0
    %1114 = vmatprep.subr.bf16.mxu0 0
    %1115 = vmatpush1.bf16.msra.mxu0 0
    %1116 = vmatprep.subr.bf16.mxu0 0
    %1117 = vmatpush1.bf16.msra.mxu0 0
    %1118 = vmatprep.subr.bf16.mxu0 0
    %1119 = vmatpush1.bf16.msra.mxu0 0
    %1120 = vmatprep.subr.bf16.mxu0 0
    %1121 = vmatpush1.bf16.msra.mxu0 %v1104
    %1122 = vmatprep.subr.bf16.mxu0 0
    %1123 = vmatpush2.bf16.msra.mxu0 0
    %1124 = vmatprep.subr.bf16.mxu0 0
    %1125 = vmatpush2.bf16.msra.mxu0 0
    %1126 = vmatprep.subr.bf16.mxu0 0
    %1127 = vmatpush2.bf16.msra.mxu0 0
    %1128 = vmatprep.subr.bf16.mxu0 0
    %1129 = vmatpush2.bf16.msra.mxu0 0
    %1130 = vmatprep.subr.bf16.mxu0 0
    %1131 = vmatpush2.bf16.msra.mxu0 0
    %1132 = vmatprep.subr.bf16.mxu0 0
    %1133 = vmatpush2.bf16.msra.mxu0 0
    %1134 = vmatprep.subr.bf16.mxu0 0
    %1135 = vmatpush2.bf16.msra.mxu0 0
    %1136 = vmatprep.subr.bf16.mxu0 0
    %1137 = vmatpush2.bf16.msra.mxu0 0
    %1138 = vmatprep.mubr.bf16.mxu0 0
    %1139 = vmatmul.mubr.bf16.gmra.mxu0 %v1101
    %v1140 = vpop.f32.mrf.mxu0
    %v1141 = vadd.f32 0.0, %v1140
    %v1142 = vpop.f32.mrf.mxu0
    %v1143 = vpop.f32.mrf.mxu0
    %v1144 = vadd.f32 0.0, %v1143
    %v1145 = vpop.f32.mrf.mxu0
    %1146 = vdwg.mxu0
    %v1147 = vunpack.c.l.b16 %v280
    %v1148 = vpack.c.b16 %v1147, %v1147
    %1149 = vrot.lane.b32.xlu0 %v1148, 96
    %v1150 = vpop.permute.xlu0 %1149
    %v1152 = vsel %vm283, %v842, 0
    %v1155 = vsel %vm849, %v1150, 0
    %1157 = vmatprep.subr.bf16.mxu0 0
    %1158 = vmatpush1.bf16.msra.mxu0 0
    %1159 = vmatprep.subr.bf16.mxu0 0
    %1160 = vmatpush1.bf16.msra.mxu0 0
    %1161 = vmatprep.subr.bf16.mxu0 0
    %1162 = vmatpush1.bf16.msra.mxu0 0
    %1163 = vmatprep.subr.bf16.mxu0 0
    %1164 = vmatpush1.bf16.msra.mxu0 0
    %1165 = vmatprep.subr.bf16.mxu0 0
    %1166 = vmatpush1.bf16.msra.mxu0 0
    %1167 = vmatprep.subr.bf16.mxu0 0
    %1168 = vmatpush1.bf16.msra.mxu0 0
    %1169 = vmatprep.subr.bf16.mxu0 0
    %1170 = vmatpush1.bf16.msra.mxu0 0
    %1171 = vmatprep.subr.bf16.mxu0 0
    %1172 = vmatpush1.bf16.msra.mxu0 %v1155
    %1173 = vmatprep.subr.bf16.mxu0 0
    %1174 = vmatpush2.bf16.msra.mxu0 0
    %1175 = vmatprep.subr.bf16.mxu0 0
    %1176 = vmatpush2.bf16.msra.mxu0 0
    %1177 = vmatprep.subr.bf16.mxu0 0
    %1178 = vmatpush2.bf16.msra.mxu0 0
    %1179 = vmatprep.subr.bf16.mxu0 0
    %1180 = vmatpush2.bf16.msra.mxu0 0
    %1181 = vmatprep.subr.bf16.mxu0 0
    %1182 = vmatpush2.bf16.msra.mxu0 0
    %1183 = vmatprep.subr.bf16.mxu0 0
    %1184 = vmatpush2.bf16.msra.mxu0 0
    %1185 = vmatprep.subr.bf16.mxu0 0
    %1186 = vmatpush2.bf16.msra.mxu0 0
    %1187 = vmatprep.subr.bf16.mxu0 0
    %1188 = vmatpush2.bf16.msra.mxu0 0
    %1189 = vmatprep.mubr.bf16.mxu0 0
    %1190 = vmatmul.mubr.bf16.gmra.mxu0 %v1152
    %v1191 = vpop.f32.mrf.mxu0
    %v1192 = vadd.f32 0.0, %v1191
    %v1193 = vpop.f32.mrf.mxu0
    %v1194 = vpop.f32.mrf.mxu0
    %v1195 = vadd.f32 0.0, %v1194
    %v1196 = vpop.f32.mrf.mxu0
    %1197 = vdwg.mxu0
    %v1198 = vunpack.c.l.b16 %v282
    %v1199 = vpack.c.b16 %v1198, %v1198
    %1200 = vrot.lane.b32.xlu0 %v1199, 96
    %v1201 = vpop.permute.xlu0 %1200
    %v1203 = vsel %vm283, %v843, 0
    %v1206 = vsel %vm849, %v1201, 0
    %1208 = vmatprep.subr.bf16.mxu0 0
    %1209 = vmatpush1.bf16.msra.mxu0 0
    %1210 = vmatprep.subr.bf16.mxu0 0
    %1211 = vmatpush1.bf16.msra.mxu0 0
    %1212 = vmatprep.subr.bf16.mxu0 0
    %1213 = vmatpush1.bf16.msra.mxu0 0
    %1214 = vmatprep.subr.bf16.mxu0 0
    %1215 = vmatpush1.bf16.msra.mxu0 0
    %1216 = vmatprep.subr.bf16.mxu0 0
    %1217 = vmatpush1.bf16.msra.mxu0 0
    %1218 = vmatprep.subr.bf16.mxu0 0
    %1219 = vmatpush1.bf16.msra.mxu0 0
    %1220 = vmatprep.subr.bf16.mxu0 0
    %1221 = vmatpush1.bf16.msra.mxu0 0
    %1222 = vmatprep.subr.bf16.mxu0 0
    %1223 = vmatpush1.bf16.msra.mxu0 %v1206
    %1224 = vmatprep.subr.bf16.mxu0 0
    %1225 = vmatpush2.bf16.msra.mxu0 0
    %1226 = vmatprep.subr.bf16.mxu0 0
    %1227 = vmatpush2.bf16.msra.mxu0 0
    %1228 = vmatprep.subr.bf16.mxu0 0
    %1229 = vmatpush2.bf16.msra.mxu0 0
    %1230 = vmatprep.subr.bf16.mxu0 0
    %1231 = vmatpush2.bf16.msra.mxu0 0
    %1232 = vmatprep.subr.bf16.mxu0 0
    %1233 = vmatpush2.bf16.msra.mxu0 0
    %1234 = vmatprep.subr.bf16.mxu0 0
    %1235 = vmatpush2.bf16.msra.mxu0 0
    %1236 = vmatprep.subr.bf16.mxu0 0
    %1237 = vmatpush2.bf16.msra.mxu0 0
    %1238 = vmatprep.subr.bf16.mxu0 0
    %1239 = vmatpush2.bf16.msra.mxu0 0
    %1240 = vmatprep.mubr.bf16.mxu0 0
    %1241 = vmatmul.mubr.bf16.gmra.mxu0 %v1203
    %v1242 = vpop.f32.mrf.mxu0
    %v1243 = vadd.f32 0.0, %v1242
    %v1244 = vpop.f32.mrf.mxu0
    %v1245 = vpop.f32.mrf.mxu0
    %v1246 = vadd.f32 0.0, %v1245
    %v1247 = vpop.f32.mrf.mxu0
    %1248 = vdwg.mxu0
    %1253 = vrot.lane.b32.xlu0 %v988, 8
    %v1254 = vpop.permute.xlu0 %1253
    %1255 = vrot.lane.b32.xlu0 %v991, 8
    %v1256 = vpop.permute.xlu0 %1255
    %1257 = vrot.lane.b32.xlu0 %v1039, 8
    %v1258 = vpop.permute.xlu0 %1257
    %1259 = vrot.lane.b32.xlu0 %v1042, 8
    %v1260 = vpop.permute.xlu0 %1259
    %1269 = vrot.lane.b32.xlu0 %v1090, 16
    %v1270 = vpop.permute.xlu0 %1269
    %1271 = vrot.lane.b32.xlu0 %v1093, 16
    %v1272 = vpop.permute.xlu0 %1271
    %1273 = vrot.lane.b32.xlu0 %v1141, 16
    %v1274 = vpop.permute.xlu0 %1273
    %1275 = vrot.lane.b32.xlu0 %v1144, 16
    %v1276 = vpop.permute.xlu0 %1275
    %1285 = vrot.lane.b32.xlu0 %v1192, 24
    %v1286 = vpop.permute.xlu0 %1285
    %1287 = vrot.lane.b32.xlu0 %v1195, 24
    %v1288 = vpop.permute.xlu0 %1287
    %1289 = vrot.lane.b32.xlu0 %v1243, 24
    %v1290 = vpop.permute.xlu0 %1289
    %1291 = vrot.lane.b32.xlu0 %v1246, 24
    %v1292 = vpop.permute.xlu0 %1291
    %v1297 = vsel %vm283, %v888, %v1254
    %v1298 = vsel %vm283, %v891, %v1256
    %v1299 = vsel %vm283, %v937, %v1258
    %v1300 = vsel %vm283, %v940, %v1260
    %v1301 = vsel %vm204, %v1297, %v1270
    %v1302 = vsel %vm204, %v1298, %v1272
    %v1303 = vsel %vm204, %v1299, %v1274
    %v1304 = vsel %vm204, %v1300, %v1276
    %vm1305 = vcmask 195584
    %v1306 = vsel %vm1305, %v1301, %v1286
    %v1307 = vsel %vm1305, %v1302, %v1288
    %v1308 = vsel %vm1305, %v1303, %v1290
    %v1309 = vsel %vm1305, %v1304, %v1292
    %v1310 = vpack.c.bf16 %v1307, %v1306
    %v1311 = vpack.c.bf16 %v1309, %v1308
    %v1312 = vld [vmem:[#allocation10] sm:$0xf]
    %v1313 = vld [vmem:[#allocation10 + $0x4] sm:$0xf]
    %v1314 = vld [vmem:[#allocation10 + $0x8] sm:$0xf]
    %v1315 = vld [vmem:[#allocation10 + $0xc] sm:$0xf]
    %v1320 = vunpack.c.l.b16 %v1312
    %v1321 = vunpack.c.l.b16 %v1313
    %v1322 = vunpack.c.l.b16 %v1314
    %v1323 = vunpack.c.l.b16 %v1315
    %v1324 = vpack.c.b16 %v1321, %v1320
    %v1325 = vpack.c.b16 %v1323, %v1322
    %1328 = vrot.lane.b32.xlu0 %v110, 32
    %v1329 = vpop.permute.xlu0 %1328
    %v1332 = vsel %vm134, %v1310, 0
    %v1335 = vsel %vm134, %v1311, 0
    %1337 = vmatprep.subr.bf16.mxu0 0
    %1338 = vmatpush1.bf16.msra.mxu0 0
    %1339 = vmatprep.subr.bf16.mxu0 0
    %1340 = vmatpush1.bf16.msra.mxu0 0
    %1341 = vmatprep.subr.bf16.mxu0 0
    %1342 = vmatpush1.bf16.msra.mxu0 0
    %1343 = vmatprep.subr.bf16.mxu0 0
    %1344 = vmatpush1.bf16.msra.mxu0 0
    %1345 = vmatprep.subr.bf16.mxu0 0
    %1346 = vmatpush1.bf16.msra.mxu0 0
    %1347 = vmatprep.subr.bf16.mxu0 0
    %1348 = vmatpush1.bf16.msra.mxu0 0
    %1349 = vmatprep.subr.bf16.mxu0 0
    %1350 = vmatpush1.bf16.msra.mxu0 %v1325
    %1351 = vmatprep.subr.bf16.mxu0 0
    %1352 = vmatpush1.bf16.msra.mxu0 %v1324
    %1353 = vmatprep.subr.bf16.mxu0 0
    %1354 = vmatpush2.bf16.msra.mxu0 0
    %1355 = vmatprep.subr.bf16.mxu0 0
    %1356 = vmatpush2.bf16.msra.mxu0 0
    %1357 = vmatprep.subr.bf16.mxu0 0
    %1358 = vmatpush2.bf16.msra.mxu0 0
    %1359 = vmatprep.subr.bf16.mxu0 0
    %1360 = vmatpush2.bf16.msra.mxu0 0
    %1361 = vmatprep.subr.bf16.mxu0 0
    %1362 = vmatpush2.bf16.msra.mxu0 0
    %1363 = vmatprep.subr.bf16.mxu0 0
    %1364 = vmatpush2.bf16.msra.mxu0 0
    %1365 = vmatprep.subr.bf16.mxu0 0
    %1366 = vmatpush2.bf16.msra.mxu0 0
    %1367 = vmatprep.subr.bf16.mxu0 0
    %1368 = vmatpush2.bf16.msra.mxu0 0
    %1369 = vmatprep.mubr.bf16.mxu0 0
    %1370 = vmatmul.mubr.bf16.gmra.mxu0 %v1332
    %v1371 = vpop.f32.mrf.mxu0
    %v1372 = vadd.f32 %v1329, %v1371
    %v1373 = vpop.f32.mrf.mxu0
    %v1374 = vpop.f32.mrf.mxu0
    %v1375 = vadd.f32 %v1329, %v1374
    %v1376 = vpop.f32.mrf.mxu0
    %1377 = vmatprep.mubr.bf16.mxu0 0
    %1378 = vmatmul.mubr.bf16.gmra.mxu0 %v1335
    %v1379 = vpop.f32.mrf.mxu0
    %v1380 = vadd.f32 %v1329, %v1379
    %v1381 = vpop.f32.mrf.mxu0
    %v1382 = vpop.f32.mrf.mxu0
    %v1383 = vadd.f32 %v1329, %v1382
    %v1384 = vpop.f32.mrf.mxu0
    %1385 = vdwg.mxu0
    %1386 = vst.msk [vmem:[#allocation11] sm:$0xff] %vm134, %v1372
    %1387 = vst.msk [vmem:[#allocation11 + $0x8] sm:$0xff] %vm134, %v1375
    %1388 = vst.msk [vmem:[#allocation11 + $0x10] sm:$0xff] %vm134, %v1380
    %1389 = vst.msk [vmem:[#allocation11 + $0x18] sm:$0xff] %vm134, %v1383
    // Predicated region
    $region46: #{tpu_custom_call.1} parent=1 // pred_check
      _
    $region47: #{tpu_custom_call.1} parent=1 // pred_check_branch
      %1391 = sbr.rel (0) target = $region49
    $region48: #{tpu_custom_call.1} parent=1 // pred_region
      %s1393 = ssub.s32 512, 512
      %1394 = vsyncadd [#allocation4], %s1393
      %s1395 = sshll.u32 [#allocation11], 4
      %s1396 = int_to_ptr.vmem [resolvable:$true] %s1395
      %1401 = dma.vmem_to_hbm [thread:$0]  %s1396, 512, %s6, [#allocation4], 128, 128, 8
    $region49: #{tpu_custom_call.1} parent=1 // pred_fallthru
      _
    // Predicated region
    $region50: #{tpu_custom_call.1} parent=1 // pred_check
      _
    $region51: #{tpu_custom_call.1} parent=1 // pred_check_branch
      %1403 = sbr.rel (0) target = $region53
    $region52: #{tpu_custom_call.1} parent=1 // pred_region
      %1404 = dma.done [#allocation4], 512
    $region53: #{tpu_custom_call.1} parent=1 // pred_fallthru
      _
    %1405 = vsyncpa [#allocation3], 1
    %1406 = vsyncpa [#allocation6], 1
    %1407 = vsyncpa [#allocation9], 1
    %1408 = vsyncpa [#allocation4], 1

</llo_original>
